<compile_context>
chip_gen: v6e
topology: v6e:2x2x1
jax: 0.10.0
libtpu: 0.0.40
codegen_flags: <defaults>
</compile_context>

<pallas_src>
import functools

import jax
import jax.numpy as jnp
from jax.experimental import pallas as pl
from jax.experimental.pallas import tpu as pltpu

LANE = 128  # TPU lane width; pad narrow feature dims up to this.


def mlp_kernel(x_ref, w1_ref, b1_ref, w2_ref, b2_ref, w3_ref, b3_ref, o_ref,
               *, num_classes):
    x = x_ref[...]                                              # (TB, Dp) bf16

    # fc1 + ReLU  (bf16 MXU, f32 accumulate, f32 epilogue)
    h1 = jnp.dot(x, w1_ref[...], preferred_element_type=jnp.float32) + b1_ref[...]
    h1 = jnp.maximum(h1, 0.0)

    # TODO(synk): nn.Dropout(0.5) — identity in eval/inference mode; add
    # pltpu.prng_seed/prng_random_bits masking if training-mode dropout is needed.

    # fc2 + ReLU  (hidden padded 64 -> 128 lanes; padded cols are exactly 0)
    h2 = jnp.dot(h1.astype(jnp.bfloat16), w2_ref[...],
                 preferred_element_type=jnp.float32) + b2_ref[...]
    h2 = jnp.maximum(h2, 0.0)

    # fc3  (classes padded num_classes -> 128 lanes)
    logits = jnp.dot(h2.astype(jnp.bfloat16), w3_ref[...],
                     preferred_element_type=jnp.float32) + b3_ref[...]

    # Mask padded class columns so they don't pollute the log_softmax.
    col = jax.lax.broadcasted_iota(jnp.int32, logits.shape, 1)
    logits = jnp.where(col < num_classes, logits, jnp.finfo(jnp.float32).min)

    # log_softmax over the class axis (last axis), max-shifted for stability.
    m = jnp.max(logits, axis=-1, keepdims=True)
    shifted = logits - m
    lse = jnp.log(jnp.sum(jnp.exp(shifted), axis=-1, keepdims=True))
    o_ref[...] = shifted - lse


def _pad_to(x, rows, cols):
    return jnp.pad(x, ((0, rows - x.shape[0]), (0, cols - x.shape[1])))


def simple_dense_forward(x_nchw, params, *, tb=128):
    """x_nchw: (B, C, H, W) float32. Returns (B, num_classes) log-probabilities."""
    w1, b1, w2, b2, w3, b3 = params
    d_in = w1.shape[0]
    h1_dim = w1.shape[1]               # 128
    h2_dim = w2.shape[1]               # 64
    num_classes = w3.shape[1]          # 10

    B = x_nchw.shape[0]
    x_flat = x_nchw.reshape(B, -1)     # nn.Flatten()
    assert x_flat.shape[1] == d_in

    # Lane/sublane-friendly padded sizes.
    d_in_p = pl.cdiv(d_in, LANE) * LANE
    h1_p = pl.cdiv(h1_dim, LANE) * LANE          # 128
    h2_p = pl.cdiv(h2_dim, LANE) * LANE          # 64 -> 128
    nc_p = pl.cdiv(num_classes, LANE) * LANE     # 10 -> 128
    b_p = pl.cdiv(B, tb) * tb

    # Pad + cast matmul operands to bf16; biases stay f32 (added post-accumulation).
    x_p = _pad_to(x_flat, b_p, d_in_p).astype(jnp.bfloat16)
    w1_p = _pad_to(w1, d_in_p, h1_p).astype(jnp.bfloat16)
    b1_p = _pad_to(b1, 1, h1_p).astype(jnp.float32)
    w2_p = _pad_to(w2, h1_p, h2_p).astype(jnp.bfloat16)
    b2_p = _pad_to(b2, 1, h2_p).astype(jnp.float32)
    w3_p = _pad_to(w3, h2_p, nc_p).astype(jnp.bfloat16)
    b3_p = _pad_to(b3, 1, nc_p).astype(jnp.float32)

    resident = lambda shape: pl.BlockSpec(shape, lambda i: (0,) * len(shape))

    out_p = pl.pallas_call(
        functools.partial(mlp_kernel, num_classes=num_classes),
        out_shape=jax.ShapeDtypeStruct((b_p, nc_p), jnp.float32),
        grid=(b_p // tb,),
        in_specs=[
            pl.BlockSpec((tb, d_in_p), lambda i: (i, 0)),   # x tile: pipelined over B
            resident((d_in_p, h1_p)), resident((1, h1_p)),  # fc1 (resident in VMEM)
            resident((h1_p, h2_p)),   resident((1, h2_p)),  # fc2
            resident((h2_p, nc_p)),   resident((1, nc_p)),  # fc3
        ],
        out_specs=pl.BlockSpec((tb, nc_p), lambda i: (i, 0)),
        compiler_params=pltpu.CompilerParams(
            dimension_semantics=("parallel",)),
    )(x_p, w1_p, b1_p, w2_p, b2_p, w3_p, b3_p)

    return out_p[:B, :num_classes]


def init_params(key, d_in, num_classes):
    """Deterministic init mimicking nn.Linear's uniform(-1/sqrt(fan_in), 1/sqrt(fan_in)).
    Weights stored as (in, out) for x @ W."""
    ks = jax.random.split(key, 6)

    def linear(kw, kb, fan_in, fan_out):
        bound = 1.0 / jnp.sqrt(fan_in)
        w = jax.random.uniform(kw, (fan_in, fan_out), jnp.float32, -bound, bound)
        b = jax.random.uniform(kb, (1, fan_out), jnp.float32, -bound, bound)
        return w, b

    w1, b1 = linear(ks[0], ks[1], d_in, 128)
    w2, b2 = linear(ks[2], ks[3], 128, 64)
    w3, b3 = linear(ks[4], ks[5], 64, num_classes)
    return (w1, b1, w2, b2, w3, b3)


def reference_forward(x_nchw, params):
    """Pure-JAX f32 reference of the same forward pass (eval-mode dropout)."""
    w1, b1, w2, b2, w3, b3 = params
    x = x_nchw.reshape(x_nchw.shape[0], -1)
    h1 = jnp.maximum(x @ w1 + b1, 0.0)
    h2 = jnp.maximum(h1 @ w2 + b2, 0.0)
    logits = h2 @ w3 + b3
    return jax.nn.log_softmax(logits, axis=-1)


if __name__ == "__main__":
    key = jax.random.PRNGKey(0)
    k_x, k_p = jax.random.split(key)

    B, C, H, W = 2, 4, 16, 16          # input_shape = (4, 16, 16) -> D_in = 1024
    num_classes = 10
    d_in = C * H * W

    x = jax.random.normal(k_x, (B, C, H, W), jnp.float32)
    params = init_params(k_p, d_in, num_classes)

    out = simple_dense_forward(x, params)
    out = jax.block_until_ready(out)

    assert out.shape == (B, num_classes)
    # log_softmax sanity: rows should (approximately) sum to 1 in prob space.
    assert jnp.allclose(jnp.exp(out).sum(axis=1), 1.0, atol=1e-3)
    # Match f32 reference (bf16 matmul operands -> loose tolerance).
    ref = reference_forward(x, params)
    assert jnp.allclose(out, ref, atol=5e-2), float(jnp.abs(out - ref).max())

    print("KERNEL_OK")
</pallas_src>

<mosaic_0001>
module attributes {stable_mosaic.version = 11 : i64} {
  func.func @mlp_kernel(%arg0: i32, %arg1: memref<128x1024xbf16, #tpu.memory_space<vmem>>, %arg2: memref<1024x128xbf16, #tpu.memory_space<vmem>>, %arg3: memref<1x128xf32, #tpu.memory_space<vmem>>, %arg4: memref<128x128xbf16, #tpu.memory_space<vmem>>, %arg5: memref<1x128xf32, #tpu.memory_space<vmem>>, %arg6: memref<128x128xbf16, #tpu.memory_space<vmem>>, %arg7: memref<1x128xf32, #tpu.memory_space<vmem>>, %arg8: memref<128x128xf32, #tpu.memory_space<vmem>>) attributes {dimension_semantics = [#tpu.dimension_semantics<parallel>], iteration_bounds = array<i64: 1>, scalar_prefetch = 0 : i64, scratch_operands = 0 : i64, tpu.core_type = #tpu.core_type<tc>, window_params = [{transform_indices = @transform_0, window_bounds = array<i64: 128, 1024>}, {pipeline_mode = #tpu.pipeline_mode<synchronous>, transform_indices = @transform_1, window_bounds = array<i64: 1024, 128>}, {pipeline_mode = #tpu.pipeline_mode<synchronous>, transform_indices = @transform_2, window_bounds = array<i64: 1, 128>}, {pipeline_mode = #tpu.pipeline_mode<synchronous>, transform_indices = @transform_3, window_bounds = array<i64: 128, 128>}, {pipeline_mode = #tpu.pipeline_mode<synchronous>, transform_indices = @transform_4, window_bounds = array<i64: 1, 128>}, {pipeline_mode = #tpu.pipeline_mode<synchronous>, transform_indices = @transform_5, window_bounds = array<i64: 128, 128>}, {pipeline_mode = #tpu.pipeline_mode<synchronous>, transform_indices = @transform_6, window_bounds = array<i64: 1, 128>}, {transform_indices = @transform_7, window_bounds = array<i64: 128, 128>}]} {
    %c0 = arith.constant 0 : index
    %c0_0 = arith.constant 0 : index
    %0 = vector.load %arg1[%c0, %c0_0] : memref<128x1024xbf16, #tpu.memory_space<vmem>>, vector<128x1024xbf16>
    %c0_1 = arith.constant 0 : index
    %c0_2 = arith.constant 0 : index
    %1 = vector.load %arg2[%c0_1, %c0_2] : memref<1024x128xbf16, #tpu.memory_space<vmem>>, vector<1024x128xbf16>
    %cst = arith.constant dense<0.000000e+00> : vector<128x128xf32>
    %2 = tpu.matmul %0, %1, %cst {dimension_numbers = #tpu.dot_dimension_numbers<[1], [0], [0], [1], [0, 0, 1, 1], [], []>} : vector<128x1024xbf16>, vector<1024x128xbf16>, vector<128x128xf32> -> vector<128x128xf32>
    %c0_3 = arith.constant 0 : index
    %c0_4 = arith.constant 0 : index
    %3 = vector.load %arg3[%c0_3, %c0_4] : memref<1x128xf32, #tpu.memory_space<vmem>>, vector<1x128xf32>
    %4 = vector.broadcast %3 : vector<1x128xf32> to vector<128x128xf32>
    %5 = arith.addf %2, %4 : vector<128x128xf32>
    %cst_5 = arith.constant 0.000000e+00 : f32
    %6 = vector.broadcast %cst_5 : f32 to vector<128x128xf32>
    %7 = arith.maximumf %5, %6 : vector<128x128xf32>
    %8 = arith.truncf %7 : vector<128x128xf32> to vector<128x128xbf16>
    %c0_6 = arith.constant 0 : index
    %c0_7 = arith.constant 0 : index
    %9 = vector.load %arg4[%c0_6, %c0_7] : memref<128x128xbf16, #tpu.memory_space<vmem>>, vector<128x128xbf16>
    %cst_8 = arith.constant dense<0.000000e+00> : vector<128x128xf32>
    %10 = tpu.matmul %8, %9, %cst_8 {dimension_numbers = #tpu.dot_dimension_numbers<[1], [0], [0], [1], [0, 0, 1, 1], [], []>} : vector<128x128xbf16>, vector<128x128xbf16>, vector<128x128xf32> -> vector<128x128xf32>
    %c0_9 = arith.constant 0 : index
    %c0_10 = arith.constant 0 : index
    %11 = vector.load %arg5[%c0_9, %c0_10] : memref<1x128xf32, #tpu.memory_space<vmem>>, vector<1x128xf32>
    %12 = vector.broadcast %11 : vector<1x128xf32> to vector<128x128xf32>
    %13 = arith.addf %10, %12 : vector<128x128xf32>
    %cst_11 = arith.constant 0.000000e+00 : f32
    %14 = vector.broadcast %cst_11 : f32 to vector<128x128xf32>
    %15 = arith.maximumf %13, %14 : vector<128x128xf32>
    %16 = arith.truncf %15 : vector<128x128xf32> to vector<128x128xbf16>
    %c0_12 = arith.constant 0 : index
    %c0_13 = arith.constant 0 : index
    %17 = vector.load %arg6[%c0_12, %c0_13] : memref<128x128xbf16, #tpu.memory_space<vmem>>, vector<128x128xbf16>
    %cst_14 = arith.constant dense<0.000000e+00> : vector<128x128xf32>
    %18 = tpu.matmul %16, %17, %cst_14 {dimension_numbers = #tpu.dot_dimension_numbers<[1], [0], [0], [1], [0, 0, 1, 1], [], []>} : vector<128x128xbf16>, vector<128x128xbf16>, vector<128x128xf32> -> vector<128x128xf32>
    %c0_15 = arith.constant 0 : index
    %c0_16 = arith.constant 0 : index
    %19 = vector.load %arg7[%c0_15, %c0_16] : memref<1x128xf32, #tpu.memory_space<vmem>>, vector<1x128xf32>
    %20 = vector.broadcast %19 : vector<1x128xf32> to vector<128x128xf32>
    %21 = arith.addf %18, %20 : vector<128x128xf32>
    %22 = tpu.iota {dimensions = array<i32: 1>} : vector<128x128xi32>
    %c10_i32 = arith.constant 10 : i32
    %23 = vector.broadcast %c10_i32 : i32 to vector<128x128xi32>
    %24 = arith.cmpi slt, %22, %23 : vector<128x128xi32>
    %cst_17 = arith.constant -3.40282347E+38 : f32
    %25 = vector.broadcast %cst_17 : f32 to vector<128x128xf32>
    %26 = arith.select %24, %21, %25 : vector<128x128xi1>, vector<128x128xf32>
    %cst_18 = arith.constant dense<0xFF800000> : vector<128xf32>
    %27 = vector.multi_reduction <maximumf>, %26, %cst_18 [1] : vector<128x128xf32> to vector<128xf32>
    %28 = vector.shape_cast %27 : vector<128xf32> to vector<128x1xf32>
    %29 = vector.broadcast %28 : vector<128x1xf32> to vector<128x128xf32>
    %30 = arith.subf %26, %29 : vector<128x128xf32>
    %31 = math.exp %30 : vector<128x128xf32>
    %cst_19 = arith.constant dense<0.000000e+00> : vector<128xf32>
    %32 = vector.multi_reduction <add>, %31, %cst_19 [1] : vector<128x128xf32> to vector<128xf32>
    %33 = vector.shape_cast %32 : vector<128xf32> to vector<128x1xf32>
    %34 = math.log %33 : vector<128x1xf32>
    %35 = vector.broadcast %34 : vector<128x1xf32> to vector<128x128xf32>
    %36 = arith.subf %30, %35 : vector<128x128xf32>
    %c0_20 = arith.constant 0 : index
    %c0_21 = arith.constant 0 : index
    %37 = vector.load %arg8[%c0_20, %c0_21] : memref<128x128xf32, #tpu.memory_space<vmem>>, vector<128x128xf32>
    tpu.vector_store %arg8[%c0_20, %c0_21], %36 {strides = array<i32>} : memref<128x128xf32, #tpu.memory_space<vmem>>, vector<128x128xf32>,
    return
  }
  func.func @transform_0(%arg0: i32) -> (i32, i32) {
    %c0_i32 = arith.constant 0 : i32
    %c0_i32_0 = arith.constant 0 : i32
    return %arg0, %c0_i32 : i32, i32
  }
  func.func @transform_1(%arg0: i32) -> (i32, i32) {
    %c0_i32 = arith.constant 0 : i32
    %c0_i32_0 = arith.constant 0 : i32
    %c0_i32_1 = arith.constant 0 : i32
    return %c0_i32, %c0_i32_0 : i32, i32
  }
  func.func @transform_2(%arg0: i32) -> (i32, i32) {
    %c0_i32 = arith.constant 0 : i32
    %c0_i32_0 = arith.constant 0 : i32
    %c0_i32_1 = arith.constant 0 : i32
    return %c0_i32, %c0_i32_0 : i32, i32
  }
  func.func @transform_3(%arg0: i32) -> (i32, i32) {
    %c0_i32 = arith.constant 0 : i32
    %c0_i32_0 = arith.constant 0 : i32
    %c0_i32_1 = arith.constant 0 : i32
    return %c0_i32, %c0_i32_0 : i32, i32
  }
  func.func @transform_4(%arg0: i32) -> (i32, i32) {
    %c0_i32 = arith.constant 0 : i32
    %c0_i32_0 = arith.constant 0 : i32
    %c0_i32_1 = arith.constant 0 : i32
    return %c0_i32, %c0_i32_0 : i32, i32
  }
  func.func @transform_5(%arg0: i32) -> (i32, i32) {
    %c0_i32 = arith.constant 0 : i32
    %c0_i32_0 = arith.constant 0 : i32
    %c0_i32_1 = arith.constant 0 : i32
    return %c0_i32, %c0_i32_0 : i32, i32
  }
  func.func @transform_6(%arg0: i32) -> (i32, i32) {
    %c0_i32 = arith.constant 0 : i32
    %c0_i32_0 = arith.constant 0 : i32
    %c0_i32_1 = arith.constant 0 : i32
    return %c0_i32, %c0_i32_0 : i32, i32
  }
  func.func @transform_7(%arg0: i32) -> (i32, i32) {
    %c0_i32 = arith.constant 0 : i32
    %c0_i32_0 = arith.constant 0 : i32
    return %arg0, %c0_i32 : i32, i32
  }
}

</mosaic_0001>

<llo_original>
// kernel: tpu_custom_call.1
$region0: #{tpu_custom_call.1}
  #allocation0 [shape = 'u32[]', space=smem, size = 0x4, offset = 0x4, fixed_abs, tag = 'smem constant byte address 0x4 - core index']
  #allocation1 [shape = 'u32[144,128]{1,0:T(1,128)}', space=vmem, size = 0x12000, scoped, tag = 'internal scratch']
  %s0 = inlined_call_operand.hbm [shape: bf16[128,1024], index: 0, kind: input, shape index: {}]
  %s1 = inlined_call_operand.hbm [shape: bf16[1024,128], index: 1, kind: input, shape index: {}]
  %s2 = inlined_call_operand.vmem [shape: f32[1,128], index: 2, kind: input, shape index: {}]
  %s3 = inlined_call_operand.hbm [shape: bf16[128,128], index: 3, kind: input, shape index: {}]
  %s4 = inlined_call_operand.vmem [shape: f32[1,128], index: 4, kind: input, shape index: {}]
  %s5 = inlined_call_operand.hbm [shape: bf16[128,128], index: 5, kind: input, shape index: {}]
  %s6 = inlined_call_operand.vmem [shape: f32[1,128], index: 6, kind: input, shape index: {}]
  %s7 = inlined_call_operand.hbm [shape: f32[128,128], index: 7, kind: output, shape index: {}]
  %s8 = sld [smem:[#allocation0]]
  $region54: #{tpu_custom_call.1} parent=0
    _
  %s10 = ssub.s32 1, %s8
  %s11 = scalar_select 0, %s10, %s8
  $region1: #{tpu_custom_call.1} parent=0
    #allocation2 [shape = 'u8[262144]{0}', space=vmem, size = 0x40000, scoped, tag = 'input window, operand 0, single buffered']
    #allocation3 [shape = 's32[1]{0}', space=sflag, size = 0x4, scoped, tag = 'scoped memory for tpu_custom_call.1']
    #allocation4 [shape = 's32[1]{0}', space=sflag, size = 0x4, scoped, tag = 'scoped memory for tpu_custom_call.1']
    #allocation5 [shape = 'u8[262144]{0}', space=vmem, size = 0x40000, scoped, tag = 'input window, operand 1, single buffered']
    #allocation6 [shape = 's32[1]{0}', space=sflag, size = 0x4, scoped, tag = 'scoped memory for tpu_custom_call.1']
    #allocation7 [shape = 'u8[32768]{0}', space=vmem, size = 0x8000, scoped, tag = 'input window, operand 3, single buffered']
    #allocation8 [shape = 'u8[32768]{0}', space=vmem, size = 0x8000, scoped, tag = 'input window, operand 5, single buffered']
    #allocation9 [shape = 's32[1]{0}', space=sflag, size = 0x4, scoped, tag = 'scoped memory for tpu_custom_call.1']
    #allocation10 [shape = 'u8[65536]{0}', space=vmem, size = 0x10000, scoped, tag = 'output window, operand 0, single buffered']
    %12 = vsyncpa [#allocation3], 0
    %13 = vsyncpa [#allocation6], 0
    %14 = vsyncpa [#allocation9], 0
    %15 = vsyncpa [#allocation4], 0
    // Predicated region
    $region2: #{tpu_custom_call.1} parent=1 // pred_check
      _
    $region3: #{tpu_custom_call.1} parent=1 // pred_check_branch
      %17 = sbr.rel (0) target = $region5
    $region4: #{tpu_custom_call.1} parent=1 // pred_region
      %s19 = ssub.s32 8192, 8192
      %20 = vsyncadd [#allocation3], %s19
      %s21 = sshll.u32 [#allocation2], 4
      %s22 = int_to_ptr.vmem [resolvable:$true] %s21
      %27 = dma.hbm_to_vmem [thread:$0]  %s0, 8192, %s22, [#allocation3], 512, 512, 32
    $region5: #{tpu_custom_call.1} parent=1 // pred_fallthru
      _
    // Predicated region
    $region6: #{tpu_custom_call.1} parent=1 // pred_check
      _
    $region7: #{tpu_custom_call.1} parent=1 // pred_check_branch
      %29 = sbr.rel (0) target = $region9
    $region8: #{tpu_custom_call.1} parent=1 // pred_region
      %s31 = ssub.s32 8192, 8192
      %32 = vsyncadd [#allocation6], %s31
      %s33 = sshll.u32 [#allocation5], 4
      %s34 = int_to_ptr.vmem [resolvable:$true] %s33
      %39 = dma.hbm_to_vmem [thread:$0]  %s1, 8192, %s34, [#allocation6], 64, 64, 4
    $region9: #{tpu_custom_call.1} parent=1 // pred_fallthru
      _
    // Predicated region
    $region10: #{tpu_custom_call.1} parent=1 // pred_check
      _
    $region11: #{tpu_custom_call.1} parent=1 // pred_check_branch
      %41 = sbr.rel (0) target = $region13
    $region12: #{tpu_custom_call.1} parent=1 // pred_region
      _
    $region13: #{tpu_custom_call.1} parent=1 // pred_fallthru
      _
    // Predicated region
    $region14: #{tpu_custom_call.1} parent=1 // pred_check
      _
    $region15: #{tpu_custom_call.1} parent=1 // pred_check_branch
      %43 = sbr.rel (0) target = $region17
    $region16: #{tpu_custom_call.1} parent=1 // pred_region
      %s45 = ssub.s32 1024, 1024
      %46 = vsyncadd [#allocation6], %s45
      %s47 = sshll.u32 [#allocation7], 4
      %s48 = int_to_ptr.vmem [resolvable:$true] %s47
      %53 = dma.hbm_to_vmem [thread:$0]  %s3, 1024, %s48, [#allocation6], 64, 64, 4
    $region17: #{tpu_custom_call.1} parent=1 // pred_fallthru
      _
    // Predicated region
    $region18: #{tpu_custom_call.1} parent=1 // pred_check
      _
    $region19: #{tpu_custom_call.1} parent=1 // pred_check_branch
      %55 = sbr.rel (0) target = $region21
    $region20: #{tpu_custom_call.1} parent=1 // pred_region
      _
    $region21: #{tpu_custom_call.1} parent=1 // pred_fallthru
      _
    // Predicated region
    $region22: #{tpu_custom_call.1} parent=1 // pred_check
      _
    $region23: #{tpu_custom_call.1} parent=1 // pred_check_branch
      %57 = sbr.rel (0) target = $region25
    $region24: #{tpu_custom_call.1} parent=1 // pred_region
      %s59 = ssub.s32 1024, 1024
      %60 = vsyncadd [#allocation9], %s59
      %s61 = sshll.u32 [#allocation8], 4
      %s62 = int_to_ptr.vmem [resolvable:$true] %s61
      %67 = dma.hbm_to_vmem [thread:$0]  %s5, 1024, %s62, [#allocation9], 64, 64, 4
    $region25: #{tpu_custom_call.1} parent=1 // pred_fallthru
      _
    // Predicated region
    $region26: #{tpu_custom_call.1} parent=1 // pred_check
      _
    $region27: #{tpu_custom_call.1} parent=1 // pred_check_branch
      %69 = sbr.rel (0) target = $region29
    $region28: #{tpu_custom_call.1} parent=1 // pred_region
      _
    $region29: #{tpu_custom_call.1} parent=1 // pred_fallthru
      _
    // Predicated region
    $region30: #{tpu_custom_call.1} parent=1 // pred_check
      _
    $region31: #{tpu_custom_call.1} parent=1 // pred_check_branch
      %71 = sbr.rel (0) target = $region33
    $region32: #{tpu_custom_call.1} parent=1 // pred_region
      %72 = dma.done [#allocation3], 8192
    $region33: #{tpu_custom_call.1} parent=1 // pred_fallthru
      _
    // Predicated region
    $region34: #{tpu_custom_call.1} parent=1 // pred_check
      _
    $region35: #{tpu_custom_call.1} parent=1 // pred_check_branch
      %74 = sbr.rel (0) target = $region37
    $region36: #{tpu_custom_call.1} parent=1 // pred_region
      %75 = dma.done [#allocation6], 8192
    $region37: #{tpu_custom_call.1} parent=1 // pred_fallthru
      _
    // Predicated region
    $region38: #{tpu_custom_call.1} parent=1 // pred_check
      _
    $region39: #{tpu_custom_call.1} parent=1 // pred_check_branch
      %77 = sbr.rel (0) target = $region41
    $region40: #{tpu_custom_call.1} parent=1 // pred_region
      %78 = dma.done [#allocation6], 1024
    $region41: #{tpu_custom_call.1} parent=1 // pred_fallthru
      _
    // Predicated region
    $region42: #{tpu_custom_call.1} parent=1 // pred_check
      _
    $region43: #{tpu_custom_call.1} parent=1 // pred_check_branch
      %80 = sbr.rel (0) target = $region45
    $region44: #{tpu_custom_call.1} parent=1 // pred_region
      %81 = dma.done [#allocation9], 1024
    $region45: #{tpu_custom_call.1} parent=1 // pred_fallthru
      _
    %v83 = vld [vmem:[#allocation2] sm:$0xff]
    %v84 = vld [vmem:[#allocation2 + $0x8] sm:$0xff]
    %v85 = vld [vmem:[#allocation2 + $0x10] sm:$0xff]
    %v86 = vld [vmem:[#allocation2 + $0x18] sm:$0xff]
    %v87 = vld [vmem:[#allocation2 + $0x20] sm:$0xff]
    %v88 = vld [vmem:[#allocation2 + $0x28] sm:$0xff]
    %v89 = vld [vmem:[#allocation2 + $0x30] sm:$0xff]
    %v90 = vld [vmem:[#allocation2 + $0x38] sm:$0xff]
    %v91 = vld [vmem:[#allocation2 + $0x40] sm:$0xff]
    %v92 = vld [vmem:[#allocation2 + $0x48] sm:$0xff]
    %v93 = vld [vmem:[#allocation2 + $0x50] sm:$0xff]
    %v94 = vld [vmem:[#allocation2 + $0x58] sm:$0xff]
    %v95 = vld [vmem:[#allocation2 + $0x60] sm:$0xff]
    %v96 = vld [vmem:[#allocation2 + $0x68] sm:$0xff]
    %v97 = vld [vmem:[#allocation2 + $0x70] sm:$0xff]
    %v98 = vld [vmem:[#allocation2 + $0x78] sm:$0xff]
    %v99 = vld [vmem:[#allocation2 + $0x80] sm:$0xff]
    %v100 = vld [vmem:[#allocation2 + $0x88] sm:$0xff]
    %v101 = vld [vmem:[#allocation2 + $0x90] sm:$0xff]
    %v102 = vld [vmem:[#allocation2 + $0x98] sm:$0xff]
    %v103 = vld [vmem:[#allocation2 + $0xa0] sm:$0xff]
    %v104 = vld [vmem:[#allocation2 + $0xa8] sm:$0xff]
    %v105 = vld [vmem:[#allocation2 + $0xb0] sm:$0xff]
    %v106 = vld [vmem:[#allocation2 + $0xb8] sm:$0xff]
    %v107 = vld [vmem:[#allocation2 + $0xc0] sm:$0xff]
    %v108 = vld [vmem:[#allocation2 + $0xc8] sm:$0xff]
    %v109 = vld [vmem:[#allocation2 + $0xd0] sm:$0xff]
    %v110 = vld [vmem:[#allocation2 + $0xd8] sm:$0xff]
    %v111 = vld [vmem:[#allocation2 + $0xe0] sm:$0xff]
    %v112 = vld [vmem:[#allocation2 + $0xe8] sm:$0xff]
    %v113 = vld [vmem:[#allocation2 + $0xf0] sm:$0xff]
    %v114 = vld [vmem:[#allocation2 + $0xf8] sm:$0xff]
    %v115 = vld [vmem:[#allocation2 + $0x100] sm:$0xff]
    %v116 = vld [vmem:[#allocation2 + $0x108] sm:$0xff]
    %v117 = vld [vmem:[#allocation2 + $0x110] sm:$0xff]
    %v118 = vld [vmem:[#allocation2 + $0x118] sm:$0xff]
    %v119 = vld [vmem:[#allocation2 + $0x120] sm:$0xff]
    %v120 = vld [vmem:[#allocation2 + $0x128] sm:$0xff]
    %v121 = vld [vmem:[#allocation2 + $0x130] sm:$0xff]
    %v122 = vld [vmem:[#allocation2 + $0x138] sm:$0xff]
    %v123 = vld [vmem:[#allocation2 + $0x140] sm:$0xff]
    %v124 = vld [vmem:[#allocation2 + $0x148] sm:$0xff]
    %v125 = vld [vmem:[#allocation2 + $0x150] sm:$0xff]
    %v126 = vld [vmem:[#allocation2 + $0x158] sm:$0xff]
    %v127 = vld [vmem:[#allocation2 + $0x160] sm:$0xff]
    %v128 = vld [vmem:[#allocation2 + $0x168] sm:$0xff]
    %v129 = vld [vmem:[#allocation2 + $0x170] sm:$0xff]
    %v130 = vld [vmem:[#allocation2 + $0x178] sm:$0xff]
    %v131 = vld [vmem:[#allocation2 + $0x180] sm:$0xff]
    %v132 = vld [vmem:[#allocation2 + $0x188] sm:$0xff]
    %v133 = vld [vmem:[#allocation2 + $0x190] sm:$0xff]
    %v134 = vld [vmem:[#allocation2 + $0x198] sm:$0xff]
    %v135 = vld [vmem:[#allocation2 + $0x1a0] sm:$0xff]
    %v136 = vld [vmem:[#allocation2 + $0x1a8] sm:$0xff]
    %v137 = vld [vmem:[#allocation2 + $0x1b0] sm:$0xff]
    %v138 = vld [vmem:[#allocation2 + $0x1b8] sm:$0xff]
    %v139 = vld [vmem:[#allocation2 + $0x1c0] sm:$0xff]
    %v140 = vld [vmem:[#allocation2 + $0x1c8] sm:$0xff]
    %v141 = vld [vmem:[#allocation2 + $0x1d0] sm:$0xff]
    %v142 = vld [vmem:[#allocation2 + $0x1d8] sm:$0xff]
    %v143 = vld [vmem:[#allocation2 + $0x1e0] sm:$0xff]
    %v144 = vld [vmem:[#allocation2 + $0x1e8] sm:$0xff]
    %v145 = vld [vmem:[#allocation2 + $0x1f0] sm:$0xff]
    %v146 = vld [vmem:[#allocation2 + $0x1f8] sm:$0xff]
    %v147 = vld [vmem:[#allocation5] sm:$0xf]
    %v148 = vld [vmem:[#allocation5 + $0x4] sm:$0xf]
    %v149 = vld [vmem:[#allocation5 + $0x8] sm:$0xf]
    %v150 = vld [vmem:[#allocation5 + $0xc] sm:$0xf]
    %v151 = vld [vmem:[#allocation5 + $0x10] sm:$0xf]
    %v152 = vld [vmem:[#allocation5 + $0x14] sm:$0xf]
    %v153 = vld [vmem:[#allocation5 + $0x18] sm:$0xf]
    %v154 = vld [vmem:[#allocation5 + $0x1c] sm:$0xf]
    %v155 = vld [vmem:[#allocation5 + $0x20] sm:$0xf]
    %v156 = vld [vmem:[#allocation5 + $0x24] sm:$0xf]
    %v157 = vld [vmem:[#allocation5 + $0x28] sm:$0xf]
    %v158 = vld [vmem:[#allocation5 + $0x2c] sm:$0xf]
    %v159 = vld [vmem:[#allocation5 + $0x30] sm:$0xf]
    %v160 = vld [vmem:[#allocation5 + $0x34] sm:$0xf]
    %v161 = vld [vmem:[#allocation5 + $0x38] sm:$0xf]
    %v162 = vld [vmem:[#allocation5 + $0x3c] sm:$0xf]
    %v163 = vld [vmem:[#allocation5 + $0x40] sm:$0xf]
    %v164 = vld [vmem:[#allocation5 + $0x44] sm:$0xf]
    %v165 = vld [vmem:[#allocation5 + $0x48] sm:$0xf]
    %v166 = vld [vmem:[#allocation5 + $0x4c] sm:$0xf]
    %v167 = vld [vmem:[#allocation5 + $0x50] sm:$0xf]
    %v168 = vld [vmem:[#allocation5 + $0x54] sm:$0xf]
    %v169 = vld [vmem:[#allocation5 + $0x58] sm:$0xf]
    %v170 = vld [vmem:[#allocation5 + $0x5c] sm:$0xf]
    %v171 = vld [vmem:[#allocation5 + $0x60] sm:$0xf]
    %v172 = vld [vmem:[#allocation5 + $0x64] sm:$0xf]
    %v173 = vld [vmem:[#allocation5 + $0x68] sm:$0xf]
    %v174 = vld [vmem:[#allocation5 + $0x6c] sm:$0xf]
    %v175 = vld [vmem:[#allocation5 + $0x70] sm:$0xf]
    %v176 = vld [vmem:[#allocation5 + $0x74] sm:$0xf]
    %v177 = vld [vmem:[#allocation5 + $0x78] sm:$0xf]
    %v178 = vld [vmem:[#allocation5 + $0x7c] sm:$0xf]
    %v179 = vld [vmem:[#allocation5 + $0x80] sm:$0xf]
    %v180 = vld [vmem:[#allocation5 + $0x84] sm:$0xf]
    %v181 = vld [vmem:[#allocation5 + $0x88] sm:$0xf]
    %v182 = vld [vmem:[#allocation5 + $0x8c] sm:$0xf]
    %v183 = vld [vmem:[#allocation5 + $0x90] sm:$0xf]
    %v184 = vld [vmem:[#allocation5 + $0x94] sm:$0xf]
    %v185 = vld [vmem:[#allocation5 + $0x98] sm:$0xf]
    %v186 = vld [vmem:[#allocation5 + $0x9c] sm:$0xf]
    %v187 = vld [vmem:[#allocation5 + $0xa0] sm:$0xf]
    %v188 = vld [vmem:[#allocation5 + $0xa4] sm:$0xf]
    %v189 = vld [vmem:[#allocation5 + $0xa8] sm:$0xf]
    %v190 = vld [vmem:[#allocation5 + $0xac] sm:$0xf]
    %v191 = vld [vmem:[#allocation5 + $0xb0] sm:$0xf]
    %v192 = vld [vmem:[#allocation5 + $0xb4] sm:$0xf]
    %v193 = vld [vmem:[#allocation5 + $0xb8] sm:$0xf]
    %v194 = vld [vmem:[#allocation5 + $0xbc] sm:$0xf]
    %v195 = vld [vmem:[#allocation5 + $0xc0] sm:$0xf]
    %v196 = vld [vmem:[#allocation5 + $0xc4] sm:$0xf]
    %v197 = vld [vmem:[#allocation5 + $0xc8] sm:$0xf]
    %v198 = vld [vmem:[#allocation5 + $0xcc] sm:$0xf]
    %v199 = vld [vmem:[#allocation5 + $0xd0] sm:$0xf]
    %v200 = vld [vmem:[#allocation5 + $0xd4] sm:$0xf]
    %v201 = vld [vmem:[#allocation5 + $0xd8] sm:$0xf]
    %v202 = vld [vmem:[#allocation5 + $0xdc] sm:$0xf]
    %v203 = vld [vmem:[#allocation5 + $0xe0] sm:$0xf]
    %v204 = vld [vmem:[#allocation5 + $0xe4] sm:$0xf]
    %v205 = vld [vmem:[#allocation5 + $0xe8] sm:$0xf]
    %v206 = vld [vmem:[#allocation5 + $0xec] sm:$0xf]
    %v207 = vld [vmem:[#allocation5 + $0xf0] sm:$0xf]
    %v208 = vld [vmem:[#allocation5 + $0xf4] sm:$0xf]
    %v209 = vld [vmem:[#allocation5 + $0xf8] sm:$0xf]
    %v210 = vld [vmem:[#allocation5 + $0xfc] sm:$0xf]
    %v211 = vld [vmem:[#allocation5 + $0x100] sm:$0xf]
    %v212 = vld [vmem:[#allocation5 + $0x104] sm:$0xf]
    %v213 = vld [vmem:[#allocation5 + $0x108] sm:$0xf]
    %v214 = vld [vmem:[#allocation5 + $0x10c] sm:$0xf]
    %v215 = vld [vmem:[#allocation5 + $0x110] sm:$0xf]
    %v216 = vld [vmem:[#allocation5 + $0x114] sm:$0xf]
    %v217 = vld [vmem:[#allocation5 + $0x118] sm:$0xf]
    %v218 = vld [vmem:[#allocation5 + $0x11c] sm:$0xf]
    %v219 = vld [vmem:[#allocation5 + $0x120] sm:$0xf]
    %v220 = vld [vmem:[#allocation5 + $0x124] sm:$0xf]
    %v221 = vld [vmem:[#allocation5 + $0x128] sm:$0xf]
    %v222 = vld [vmem:[#allocation5 + $0x12c] sm:$0xf]
    %v223 = vld [vmem:[#allocation5 + $0x130] sm:$0xf]
    %v224 = vld [vmem:[#allocation5 + $0x134] sm:$0xf]
    %v225 = vld [vmem:[#allocation5 + $0x138] sm:$0xf]
    %v226 = vld [vmem:[#allocation5 + $0x13c] sm:$0xf]
    %v227 = vld [vmem:[#allocation5 + $0x140] sm:$0xf]
    %v228 = vld [vmem:[#allocation5 + $0x144] sm:$0xf]
    %v229 = vld [vmem:[#allocation5 + $0x148] sm:$0xf]
    %v230 = vld [vmem:[#allocation5 + $0x14c] sm:$0xf]
    %v231 = vld [vmem:[#allocation5 + $0x150] sm:$0xf]
    %v232 = vld [vmem:[#allocation5 + $0x154] sm:$0xf]
    %v233 = vld [vmem:[#allocation5 + $0x158] sm:$0xf]
    %v234 = vld [vmem:[#allocation5 + $0x15c] sm:$0xf]
    %v235 = vld [vmem:[#allocation5 + $0x160] sm:$0xf]
    %v236 = vld [vmem:[#allocation5 + $0x164] sm:$0xf]
    %v237 = vld [vmem:[#allocation5 + $0x168] sm:$0xf]
    %v238 = vld [vmem:[#allocation5 + $0x16c] sm:$0xf]
    %v239 = vld [vmem:[#allocation5 + $0x170] sm:$0xf]
    %v240 = vld [vmem:[#allocation5 + $0x174] sm:$0xf]
    %v241 = vld [vmem:[#allocation5 + $0x178] sm:$0xf]
    %v242 = vld [vmem:[#allocation5 + $0x17c] sm:$0xf]
    %v243 = vld [vmem:[#allocation5 + $0x180] sm:$0xf]
    %v244 = vld [vmem:[#allocation5 + $0x184] sm:$0xf]
    %v245 = vld [vmem:[#allocation5 + $0x188] sm:$0xf]
    %v246 = vld [vmem:[#allocation5 + $0x18c] sm:$0xf]
    %v247 = vld [vmem:[#allocation5 + $0x190] sm:$0xf]
    %v248 = vld [vmem:[#allocation5 + $0x194] sm:$0xf]
    %v249 = vld [vmem:[#allocation5 + $0x198] sm:$0xf]
    %v250 = vld [vmem:[#allocation5 + $0x19c] sm:$0xf]
    %v251 = vld [vmem:[#allocation5 + $0x1a0] sm:$0xf]
    %v252 = vld [vmem:[#allocation5 + $0x1a4] sm:$0xf]
    %v253 = vld [vmem:[#allocation5 + $0x1a8] sm:$0xf]
    %v254 = vld [vmem:[#allocation5 + $0x1ac] sm:$0xf]
    %v255 = vld [vmem:[#allocation5 + $0x1b0] sm:$0xf]
    %v256 = vld [vmem:[#allocation5 + $0x1b4] sm:$0xf]
    %v257 = vld [vmem:[#allocation5 + $0x1b8] sm:$0xf]
    %v258 = vld [vmem:[#allocation5 + $0x1bc] sm:$0xf]
    %v259 = vld [vmem:[#allocation5 + $0x1c0] sm:$0xf]
    %v260 = vld [vmem:[#allocation5 + $0x1c4] sm:$0xf]
    %v261 = vld [vmem:[#allocation5 + $0x1c8] sm:$0xf]
    %v262 = vld [vmem:[#allocation5 + $0x1cc] sm:$0xf]
    %v263 = vld [vmem:[#allocation5 + $0x1d0] sm:$0xf]
    %v264 = vld [vmem:[#allocation5 + $0x1d4] sm:$0xf]
    %v265 = vld [vmem:[#allocation5 + $0x1d8] sm:$0xf]
    %v266 = vld [vmem:[#allocation5 + $0x1dc] sm:$0xf]
    %v267 = vld [vmem:[#allocation5 + $0x1e0] sm:$0xf]
    %v268 = vld [vmem:[#allocation5 + $0x1e4] sm:$0xf]
    %v269 = vld [vmem:[#allocation5 + $0x1e8] sm:$0xf]
    %v270 = vld [vmem:[#allocation5 + $0x1ec] sm:$0xf]
    %v271 = vld [vmem:[#allocation5 + $0x1f0] sm:$0xf]
    %v272 = vld [vmem:[#allocation5 + $0x1f4] sm:$0xf]
    %v273 = vld [vmem:[#allocation5 + $0x1f8] sm:$0xf]
    %v274 = vld [vmem:[#allocation5 + $0x1fc] sm:$0xf]
    %v275 = vld [vmem:[%s2] sm:$0x1]
    %v277 = vlaneseq
    %v278 = vshrl.u32 %v277, 7
    %v279 = vsub.s32 0, %v278
    %v280 = vrot.slane %v275, %v279
    %v346 = vunpack.c.l.b16 %v83
    %v347 = vunpack.c.h.b16 %v83
    %v348 = vunpack.c.l.b16 %v84
    %v349 = vunpack.c.h.b16 %v84
    %v350 = vunpack.c.l.b16 %v85
    %v351 = vunpack.c.h.b16 %v85
    %v352 = vunpack.c.l.b16 %v86
    %v353 = vunpack.c.h.b16 %v86
    %v354 = vunpack.c.l.b16 %v87
    %v355 = vunpack.c.h.b16 %v87
    %v356 = vunpack.c.l.b16 %v88
    %v357 = vunpack.c.h.b16 %v88
    %v358 = vunpack.c.l.b16 %v89
    %v359 = vunpack.c.h.b16 %v89
    %v360 = vunpack.c.l.b16 %v90
    %v361 = vunpack.c.h.b16 %v90
    %v362 = vunpack.c.l.b16 %v91
    %v363 = vunpack.c.h.b16 %v91
    %v364 = vunpack.c.l.b16 %v92
    %v365 = vunpack.c.h.b16 %v92
    %v366 = vunpack.c.l.b16 %v93
    %v367 = vunpack.c.h.b16 %v93
    %v368 = vunpack.c.l.b16 %v94
    %v369 = vunpack.c.h.b16 %v94
    %v370 = vunpack.c.l.b16 %v95
    %v371 = vunpack.c.h.b16 %v95
    %v372 = vunpack.c.l.b16 %v96
    %v373 = vunpack.c.h.b16 %v96
    %v374 = vunpack.c.l.b16 %v97
    %v375 = vunpack.c.h.b16 %v97
    %v376 = vunpack.c.l.b16 %v98
    %v377 = vunpack.c.h.b16 %v98
    %v378 = vunpack.c.l.b16 %v99
    %v379 = vunpack.c.h.b16 %v99
    %v380 = vunpack.c.l.b16 %v100
    %v381 = vunpack.c.h.b16 %v100
    %v382 = vunpack.c.l.b16 %v101
    %v383 = vunpack.c.h.b16 %v101
    %v384 = vunpack.c.l.b16 %v102
    %v385 = vunpack.c.h.b16 %v102
    %v386 = vunpack.c.l.b16 %v103
    %v387 = vunpack.c.h.b16 %v103
    %v388 = vunpack.c.l.b16 %v104
    %v389 = vunpack.c.h.b16 %v104
    %v390 = vunpack.c.l.b16 %v105
    %v391 = vunpack.c.h.b16 %v105
    %v392 = vunpack.c.l.b16 %v106
    %v393 = vunpack.c.h.b16 %v106
    %v394 = vunpack.c.l.b16 %v107
    %v395 = vunpack.c.h.b16 %v107
    %v396 = vunpack.c.l.b16 %v108
    %v397 = vunpack.c.h.b16 %v108
    %v398 = vunpack.c.l.b16 %v109
    %v399 = vunpack.c.h.b16 %v109
    %v400 = vunpack.c.l.b16 %v110
    %v401 = vunpack.c.h.b16 %v110
    %v402 = vunpack.c.l.b16 %v111
    %v403 = vunpack.c.h.b16 %v111
    %v404 = vunpack.c.l.b16 %v112
    %v405 = vunpack.c.h.b16 %v112
    %v406 = vunpack.c.l.b16 %v113
    %v407 = vunpack.c.h.b16 %v113
    %v408 = vunpack.c.l.b16 %v114
    %v409 = vunpack.c.h.b16 %v114
    %v410 = vunpack.c.l.b16 %v115
    %v411 = vunpack.c.h.b16 %v115
    %v412 = vunpack.c.l.b16 %v116
    %v413 = vunpack.c.h.b16 %v116
    %v414 = vunpack.c.l.b16 %v117
    %v415 = vunpack.c.h.b16 %v117
    %v416 = vunpack.c.l.b16 %v118
    %v417 = vunpack.c.h.b16 %v118
    %v418 = vunpack.c.l.b16 %v119
    %v419 = vunpack.c.h.b16 %v119
    %v420 = vunpack.c.l.b16 %v120
    %v421 = vunpack.c.h.b16 %v120
    %v422 = vunpack.c.l.b16 %v121
    %v423 = vunpack.c.h.b16 %v121
    %v424 = vunpack.c.l.b16 %v122
    %v425 = vunpack.c.h.b16 %v122
    %v426 = vunpack.c.l.b16 %v123
    %v427 = vunpack.c.h.b16 %v123
    %v428 = vunpack.c.l.b16 %v124
    %v429 = vunpack.c.h.b16 %v124
    %v430 = vunpack.c.l.b16 %v125
    %v431 = vunpack.c.h.b16 %v125
    %v432 = vunpack.c.l.b16 %v126
    %v433 = vunpack.c.h.b16 %v126
    %v434 = vunpack.c.l.b16 %v127
    %v435 = vunpack.c.h.b16 %v127
    %v436 = vunpack.c.l.b16 %v128
    %v437 = vunpack.c.h.b16 %v128
    %v438 = vunpack.c.l.b16 %v129
    %v439 = vunpack.c.h.b16 %v129
    %v440 = vunpack.c.l.b16 %v130
    %v441 = vunpack.c.h.b16 %v130
    %v442 = vunpack.c.l.b16 %v131
    %v443 = vunpack.c.h.b16 %v131
    %v444 = vunpack.c.l.b16 %v132
    %v445 = vunpack.c.h.b16 %v132
    %v446 = vunpack.c.l.b16 %v133
    %v447 = vunpack.c.h.b16 %v133
    %v448 = vunpack.c.l.b16 %v134
    %v449 = vunpack.c.h.b16 %v134
    %v450 = vunpack.c.l.b16 %v135
    %v451 = vunpack.c.h.b16 %v135
    %v452 = vunpack.c.l.b16 %v136
    %v453 = vunpack.c.h.b16 %v136
    %v454 = vunpack.c.l.b16 %v137
    %v455 = vunpack.c.h.b16 %v137
    %v456 = vunpack.c.l.b16 %v138
    %v457 = vunpack.c.h.b16 %v138
    %v458 = vunpack.c.l.b16 %v139
    %v459 = vunpack.c.h.b16 %v139
    %v460 = vunpack.c.l.b16 %v140
    %v461 = vunpack.c.h.b16 %v140
    %v462 = vunpack.c.l.b16 %v141
    %v463 = vunpack.c.h.b16 %v141
    %v464 = vunpack.c.l.b16 %v142
    %v465 = vunpack.c.h.b16 %v142
    %v466 = vunpack.c.l.b16 %v143
    %v467 = vunpack.c.h.b16 %v143
    %v468 = vunpack.c.l.b16 %v144
    %v469 = vunpack.c.h.b16 %v144
    %v470 = vunpack.c.l.b16 %v145
    %v471 = vunpack.c.h.b16 %v145
    %v472 = vunpack.c.l.b16 %v146
    %v473 = vunpack.c.h.b16 %v146
    %v474 = vpack.c.b16 %v354, %v346
    %v475 = vpack.c.b16 %v355, %v347
    %v476 = vpack.c.b16 %v356, %v348
    %v477 = vpack.c.b16 %v357, %v349
    %v478 = vpack.c.b16 %v358, %v350
    %v479 = vpack.c.b16 %v359, %v351
    %v480 = vpack.c.b16 %v360, %v352
    %v481 = vpack.c.b16 %v361, %v353
    %v482 = vpack.c.b16 %v370, %v362
    %v483 = vpack.c.b16 %v371, %v363
    %v484 = vpack.c.b16 %v372, %v364
    %v485 = vpack.c.b16 %v373, %v365
    %v486 = vpack.c.b16 %v374, %v366
    %v487 = vpack.c.b16 %v375, %v367
    %v488 = vpack.c.b16 %v376, %v368
    %v489 = vpack.c.b16 %v377, %v369
    %v490 = vpack.c.b16 %v386, %v378
    %v491 = vpack.c.b16 %v387, %v379
    %v492 = vpack.c.b16 %v388, %v380
    %v493 = vpack.c.b16 %v389, %v381
    %v494 = vpack.c.b16 %v390, %v382
    %v495 = vpack.c.b16 %v391, %v383
    %v496 = vpack.c.b16 %v392, %v384
    %v497 = vpack.c.b16 %v393, %v385
    %v498 = vpack.c.b16 %v402, %v394
    %v499 = vpack.c.b16 %v403, %v395
    %v500 = vpack.c.b16 %v404, %v396
    %v501 = vpack.c.b16 %v405, %v397
    %v502 = vpack.c.b16 %v406, %v398
    %v503 = vpack.c.b16 %v407, %v399
    %v504 = vpack.c.b16 %v408, %v400
    %v505 = vpack.c.b16 %v409, %v401
    %v506 = vpack.c.b16 %v418, %v410
    %v507 = vpack.c.b16 %v419, %v411
    %v508 = vpack.c.b16 %v420, %v412
    %v509 = vpack.c.b16 %v421, %v413
    %v510 = vpack.c.b16 %v422, %v414
    %v511 = vpack.c.b16 %v423, %v415
    %v512 = vpack.c.b16 %v424, %v416
    %v513 = vpack.c.b16 %v425, %v417
    %v514 = vpack.c.b16 %v434, %v426
    %v515 = vpack.c.b16 %v435, %v427
    %v516 = vpack.c.b16 %v436, %v428
    %v517 = vpack.c.b16 %v437, %v429
    %v518 = vpack.c.b16 %v438, %v430
    %v519 = vpack.c.b16 %v439, %v431
    %v520 = vpack.c.b16 %v440, %v432
    %v521 = vpack.c.b16 %v441, %v433
    %v522 = vpack.c.b16 %v450, %v442
    %v523 = vpack.c.b16 %v451, %v443
    %v524 = vpack.c.b16 %v452, %v444
    %v525 = vpack.c.b16 %v453, %v445
    %v526 = vpack.c.b16 %v454, %v446
    %v527 = vpack.c.b16 %v455, %v447
    %v528 = vpack.c.b16 %v456, %v448
    %v529 = vpack.c.b16 %v457, %v449
    %v530 = vpack.c.b16 %v466, %v458
    %v531 = vpack.c.b16 %v467, %v459
    %v532 = vpack.c.b16 %v468, %v460
    %v533 = vpack.c.b16 %v469, %v461
    %v534 = vpack.c.b16 %v470, %v462
    %v535 = vpack.c.b16 %v471, %v463
    %v536 = vpack.c.b16 %v472, %v464
    %v537 = vpack.c.b16 %v473, %v465
    %v730 = vunpack.c.l.b16 %v147
    %v731 = vunpack.c.l.b16 %v148
    %v732 = vunpack.c.l.b16 %v149
    %v733 = vunpack.c.l.b16 %v150
    %v734 = vunpack.c.l.b16 %v151
    %v735 = vunpack.c.l.b16 %v152
    %v736 = vunpack.c.l.b16 %v153
    %v737 = vunpack.c.l.b16 %v154
    %v738 = vunpack.c.l.b16 %v155
    %v739 = vunpack.c.l.b16 %v156
    %v740 = vunpack.c.l.b16 %v157
    %v741 = vunpack.c.l.b16 %v158
    %v742 = vunpack.c.l.b16 %v159
    %v743 = vunpack.c.l.b16 %v160
    %v744 = vunpack.c.l.b16 %v161
    %v745 = vunpack.c.l.b16 %v162
    %v746 = vunpack.c.l.b16 %v163
    %v747 = vunpack.c.l.b16 %v164
    %v748 = vunpack.c.l.b16 %v165
    %v749 = vunpack.c.l.b16 %v166
    %v750 = vunpack.c.l.b16 %v167
    %v751 = vunpack.c.l.b16 %v168
    %v752 = vunpack.c.l.b16 %v169
    %v753 = vunpack.c.l.b16 %v170
    %v754 = vunpack.c.l.b16 %v171
    %v755 = vunpack.c.l.b16 %v172
    %v756 = vunpack.c.l.b16 %v173
    %v757 = vunpack.c.l.b16 %v174
    %v758 = vunpack.c.l.b16 %v175
    %v759 = vunpack.c.l.b16 %v176
    %v760 = vunpack.c.l.b16 %v177
    %v761 = vunpack.c.l.b16 %v178
    %v762 = vunpack.c.l.b16 %v179
    %v763 = vunpack.c.l.b16 %v180
    %v764 = vunpack.c.l.b16 %v181
    %v765 = vunpack.c.l.b16 %v182
    %v766 = vunpack.c.l.b16 %v183
    %v767 = vunpack.c.l.b16 %v184
    %v768 = vunpack.c.l.b16 %v185
    %v769 = vunpack.c.l.b16 %v186
    %v770 = vunpack.c.l.b16 %v187
    %v771 = vunpack.c.l.b16 %v188
    %v772 = vunpack.c.l.b16 %v189
    %v773 = vunpack.c.l.b16 %v190
    %v774 = vunpack.c.l.b16 %v191
    %v775 = vunpack.c.l.b16 %v192
    %v776 = vunpack.c.l.b16 %v193
    %v777 = vunpack.c.l.b16 %v194
    %v778 = vunpack.c.l.b16 %v195
    %v779 = vunpack.c.l.b16 %v196
    %v780 = vunpack.c.l.b16 %v197
    %v781 = vunpack.c.l.b16 %v198
    %v782 = vunpack.c.l.b16 %v199
    %v783 = vunpack.c.l.b16 %v200
    %v784 = vunpack.c.l.b16 %v201
    %v785 = vunpack.c.l.b16 %v202
    %v786 = vunpack.c.l.b16 %v203
    %v787 = vunpack.c.l.b16 %v204
    %v788 = vunpack.c.l.b16 %v205
    %v789 = vunpack.c.l.b16 %v206
    %v790 = vunpack.c.l.b16 %v207
    %v791 = vunpack.c.l.b16 %v208
    %v792 = vunpack.c.l.b16 %v209
    %v793 = vunpack.c.l.b16 %v210
    %v794 = vunpack.c.l.b16 %v211
    %v795 = vunpack.c.l.b16 %v212
    %v796 = vunpack.c.l.b16 %v213
    %v797 = vunpack.c.l.b16 %v214
    %v798 = vunpack.c.l.b16 %v215
    %v799 = vunpack.c.l.b16 %v216
    %v800 = vunpack.c.l.b16 %v217
    %v801 = vunpack.c.l.b16 %v218
    %v802 = vunpack.c.l.b16 %v219
    %v803 = vunpack.c.l.b16 %v220
    %v804 = vunpack.c.l.b16 %v221
    %v805 = vunpack.c.l.b16 %v222
    %v806 = vunpack.c.l.b16 %v223
    %v807 = vunpack.c.l.b16 %v224
    %v808 = vunpack.c.l.b16 %v225
    %v809 = vunpack.c.l.b16 %v226
    %v810 = vunpack.c.l.b16 %v227
    %v811 = vunpack.c.l.b16 %v228
    %v812 = vunpack.c.l.b16 %v229
    %v813 = vunpack.c.l.b16 %v230
    %v814 = vunpack.c.l.b16 %v231
    %v815 = vunpack.c.l.b16 %v232
    %v816 = vunpack.c.l.b16 %v233
    %v817 = vunpack.c.l.b16 %v234
    %v818 = vunpack.c.l.b16 %v235
    %v819 = vunpack.c.l.b16 %v236
    %v820 = vunpack.c.l.b16 %v237
    %v821 = vunpack.c.l.b16 %v238
    %v822 = vunpack.c.l.b16 %v239
    %v823 = vunpack.c.l.b16 %v240
    %v824 = vunpack.c.l.b16 %v241
    %v825 = vunpack.c.l.b16 %v242
    %v826 = vunpack.c.l.b16 %v243
    %v827 = vunpack.c.l.b16 %v244
    %v828 = vunpack.c.l.b16 %v245
    %v829 = vunpack.c.l.b16 %v246
    %v830 = vunpack.c.l.b16 %v247
    %v831 = vunpack.c.l.b16 %v248
    %v832 = vunpack.c.l.b16 %v249
    %v833 = vunpack.c.l.b16 %v250
    %v834 = vunpack.c.l.b16 %v251
    %v835 = vunpack.c.l.b16 %v252
    %v836 = vunpack.c.l.b16 %v253
    %v837 = vunpack.c.l.b16 %v254
    %v838 = vunpack.c.l.b16 %v255
    %v839 = vunpack.c.l.b16 %v256
    %v840 = vunpack.c.l.b16 %v257
    %v841 = vunpack.c.l.b16 %v258
    %v842 = vunpack.c.l.b16 %v259
    %v843 = vunpack.c.l.b16 %v260
    %v844 = vunpack.c.l.b16 %v261
    %v845 = vunpack.c.l.b16 %v262
    %v846 = vunpack.c.l.b16 %v263
    %v847 = vunpack.c.l.b16 %v264
    %v848 = vunpack.c.l.b16 %v265
    %v849 = vunpack.c.l.b16 %v266
    %v850 = vunpack.c.l.b16 %v267
    %v851 = vunpack.c.l.b16 %v268
    %v852 = vunpack.c.l.b16 %v269
    %v853 = vunpack.c.l.b16 %v270
    %v854 = vunpack.c.l.b16 %v271
    %v855 = vunpack.c.l.b16 %v272
    %v856 = vunpack.c.l.b16 %v273
    %v857 = vunpack.c.l.b16 %v274
    %v858 = vpack.c.b16 %v731, %v730
    %v859 = vpack.c.b16 %v733, %v732
    %v860 = vpack.c.b16 %v735, %v734
    %v861 = vpack.c.b16 %v737, %v736
    %v862 = vpack.c.b16 %v739, %v738
    %v863 = vpack.c.b16 %v741, %v740
    %v864 = vpack.c.b16 %v743, %v742
    %v865 = vpack.c.b16 %v745, %v744
    %v866 = vpack.c.b16 %v747, %v746
    %v867 = vpack.c.b16 %v749, %v748
    %v868 = vpack.c.b16 %v751, %v750
    %v869 = vpack.c.b16 %v753, %v752
    %v870 = vpack.c.b16 %v755, %v754
    %v871 = vpack.c.b16 %v757, %v756
    %v872 = vpack.c.b16 %v759, %v758
    %v873 = vpack.c.b16 %v761, %v760
    %v874 = vpack.c.b16 %v763, %v762
    %v875 = vpack.c.b16 %v765, %v764
    %v876 = vpack.c.b16 %v767, %v766
    %v877 = vpack.c.b16 %v769, %v768
    %v878 = vpack.c.b16 %v771, %v770
    %v879 = vpack.c.b16 %v773, %v772
    %v880 = vpack.c.b16 %v775, %v774
    %v881 = vpack.c.b16 %v777, %v776
    %v882 = vpack.c.b16 %v779, %v778
    %v883 = vpack.c.b16 %v781, %v780
    %v884 = vpack.c.b16 %v783, %v782
    %v885 = vpack.c.b16 %v785, %v784
    %v886 = vpack.c.b16 %v787, %v786
    %v887 = vpack.c.b16 %v789, %v788
    %v888 = vpack.c.b16 %v791, %v790
    %v889 = vpack.c.b16 %v793, %v792
    %v890 = vpack.c.b16 %v795, %v794
    %v891 = vpack.c.b16 %v797, %v796
    %v892 = vpack.c.b16 %v799, %v798
    %v893 = vpack.c.b16 %v801, %v800
    %v894 = vpack.c.b16 %v803, %v802
    %v895 = vpack.c.b16 %v805, %v804
    %v896 = vpack.c.b16 %v807, %v806
    %v897 = vpack.c.b16 %v809, %v808
    %v898 = vpack.c.b16 %v811, %v810
    %v899 = vpack.c.b16 %v813, %v812
    %v900 = vpack.c.b16 %v815, %v814
    %v901 = vpack.c.b16 %v817, %v816
    %v902 = vpack.c.b16 %v819, %v818
    %v903 = vpack.c.b16 %v821, %v820
    %v904 = vpack.c.b16 %v823, %v822
    %v905 = vpack.c.b16 %v825, %v824
    %v906 = vpack.c.b16 %v827, %v826
    %v907 = vpack.c.b16 %v829, %v828
    %v908 = vpack.c.b16 %v831, %v830
    %v909 = vpack.c.b16 %v833, %v832
    %v910 = vpack.c.b16 %v835, %v834
    %v911 = vpack.c.b16 %v837, %v836
    %v912 = vpack.c.b16 %v839, %v838
    %v913 = vpack.c.b16 %v841, %v840
    %v914 = vpack.c.b16 %v843, %v842
    %v915 = vpack.c.b16 %v845, %v844
    %v916 = vpack.c.b16 %v847, %v846
    %v917 = vpack.c.b16 %v849, %v848
    %v918 = vpack.c.b16 %v851, %v850
    %v919 = vpack.c.b16 %v853, %v852
    %v920 = vpack.c.b16 %v855, %v854
    %v921 = vpack.c.b16 %v857, %v856
    %986 = vmatprep.subr.bf16.mxu0 0
    %987 = vmatpush1.bf16.msra.mxu0 %v865
    %988 = vmatprep.subr.bf16.mxu0 0
    %989 = vmatpush1.bf16.msra.mxu0 %v864
    %990 = vmatprep.subr.bf16.mxu0 0
    %991 = vmatpush1.bf16.msra.mxu0 %v863
    %992 = vmatprep.subr.bf16.mxu0 0
    %993 = vmatpush1.bf16.msra.mxu0 %v862
    %994 = vmatprep.subr.bf16.mxu0 0
    %995 = vmatpush1.bf16.msra.mxu0 %v861
    %996 = vmatprep.subr.bf16.mxu0 0
    %997 = vmatpush1.bf16.msra.mxu0 %v860
    %998 = vmatprep.subr.bf16.mxu0 0
    %999 = vmatpush1.bf16.msra.mxu0 %v859
    %1000 = vmatprep.subr.bf16.mxu0 0
    %1001 = vmatpush1.bf16.msra.mxu0 %v858
    %1002 = vmatprep.subr.bf16.mxu0 0
    %1003 = vmatpush2.bf16.msra.mxu0 %v873
    %1004 = vmatprep.subr.bf16.mxu0 0
    %1005 = vmatpush2.bf16.msra.mxu0 %v872
    %1006 = vmatprep.subr.bf16.mxu0 0
    %1007 = vmatpush2.bf16.msra.mxu0 %v871
    %1008 = vmatprep.subr.bf16.mxu0 0
    %1009 = vmatpush2.bf16.msra.mxu0 %v870
    %1010 = vmatprep.subr.bf16.mxu0 0
    %1011 = vmatpush2.bf16.msra.mxu0 %v869
    %1012 = vmatprep.subr.bf16.mxu0 0
    %1013 = vmatpush2.bf16.msra.mxu0 %v868
    %1014 = vmatprep.subr.bf16.mxu0 0
    %1015 = vmatpush2.bf16.msra.mxu0 %v867
    %1016 = vmatprep.subr.bf16.mxu0 0
    %1017 = vmatpush2.bf16.msra.mxu0 %v866
    %1018 = vmatprep.mubr.bf16.mxu0 %v475
    %1019 = vmatmul.mubr.bf16.gmra.mxu0 %v474
    %v1020 = vpop.f32.mrf.mxu0
    %v1021 = vadd.f32 %v280, %v1020
    %v1022 = vpop.f32.mrf.mxu0
    %v1023 = vpop.f32.mrf.mxu0
    %v1024 = vadd.f32 %v280, %v1023
    %v1025 = vpop.f32.mrf.mxu0
    %1026 = vmatprep.mubr.bf16.mxu0 %v483
    %1027 = vmatmul.mubr.bf16.gmra.mxu0 %v482
    %v1028 = vpop.f32.mrf.mxu0
    %v1029 = vadd.f32 %v280, %v1028
    %v1030 = vpop.f32.mrf.mxu0
    %v1031 = vpop.f32.mrf.mxu0
    %v1032 = vadd.f32 %v280, %v1031
    %v1033 = vpop.f32.mrf.mxu0
    %1034 = vmatprep.mubr.bf16.mxu0 %v491
    %1035 = vmatmul.mubr.bf16.gmra.mxu0 %v490
    %v1036 = vpop.f32.mrf.mxu0
    %v1037 = vadd.f32 %v280, %v1036
    %v1038 = vpop.f32.mrf.mxu0
    %v1039 = vpop.f32.mrf.mxu0
    %v1040 = vadd.f32 %v280, %v1039
    %v1041 = vpop.f32.mrf.mxu0
    %1042 = vmatprep.mubr.bf16.mxu0 %v499
    %1043 = vmatmul.mubr.bf16.gmra.mxu0 %v498
    %v1044 = vpop.f32.mrf.mxu0
    %v1045 = vadd.f32 %v280, %v1044
    %v1046 = vpop.f32.mrf.mxu0
    %v1047 = vpop.f32.mrf.mxu0
    %v1048 = vadd.f32 %v280, %v1047
    %v1049 = vpop.f32.mrf.mxu0
    %1050 = vmatprep.mubr.bf16.mxu0 %v507
    %1051 = vmatmul.mubr.bf16.gmra.mxu0 %v506
    %v1052 = vpop.f32.mrf.mxu0
    %v1053 = vadd.f32 %v280, %v1052
    %v1054 = vpop.f32.mrf.mxu0
    %v1055 = vpop.f32.mrf.mxu0
    %v1056 = vadd.f32 %v280, %v1055
    %v1057 = vpop.f32.mrf.mxu0
    %1058 = vmatprep.mubr.bf16.mxu0 %v515
    %1059 = vmatmul.mubr.bf16.gmra.mxu0 %v514
    %v1060 = vpop.f32.mrf.mxu0
    %v1061 = vadd.f32 %v280, %v1060
    %v1062 = vpop.f32.mrf.mxu0
    %v1063 = vpop.f32.mrf.mxu0
    %v1064 = vadd.f32 %v280, %v1063
    %v1065 = vpop.f32.mrf.mxu0
    %1066 = vmatprep.mubr.bf16.mxu0 %v523
    %1067 = vmatmul.mubr.bf16.gmra.mxu0 %v522
    %v1068 = vpop.f32.mrf.mxu0
    %v1069 = vadd.f32 %v280, %v1068
    %v1070 = vpop.f32.mrf.mxu0
    %v1071 = vpop.f32.mrf.mxu0
    %v1072 = vadd.f32 %v280, %v1071
    %v1073 = vpop.f32.mrf.mxu0
    %1074 = vmatprep.mubr.bf16.mxu0 %v531
    %1075 = vmatmul.mubr.bf16.gmra.mxu0 %v530
    %v1076 = vpop.f32.mrf.mxu0
    %v1077 = vadd.f32 %v280, %v1076
    %v1078 = vpop.f32.mrf.mxu0
    %v1079 = vpop.f32.mrf.mxu0
    %v1080 = vadd.f32 %v280, %v1079
    %v1081 = vpop.f32.mrf.mxu0
    %1082 = vdwg.mxu0
    %1083 = vmatprep.subr.bf16.mxu0 0
    %1084 = vmatpush1.bf16.msra.mxu0 %v881
    %1085 = vmatprep.subr.bf16.mxu0 0
    %1086 = vmatpush1.bf16.msra.mxu0 %v880
    %1087 = vmatprep.subr.bf16.mxu0 0
    %1088 = vmatpush1.bf16.msra.mxu0 %v879
    %1089 = vmatprep.subr.bf16.mxu0 0
    %1090 = vmatpush1.bf16.msra.mxu0 %v878
    %1091 = vmatprep.subr.bf16.mxu0 0
    %1092 = vmatpush1.bf16.msra.mxu0 %v877
    %1093 = vmatprep.subr.bf16.mxu0 0
    %1094 = vmatpush1.bf16.msra.mxu0 %v876
    %1095 = vmatprep.subr.bf16.mxu0 0
    %1096 = vmatpush1.bf16.msra.mxu0 %v875
    %1097 = vmatprep.subr.bf16.mxu0 0
    %1098 = vmatpush1.bf16.msra.mxu0 %v874
    %1099 = vmatprep.subr.bf16.mxu0 0
    %1100 = vmatpush2.bf16.msra.mxu0 %v889
    %1101 = vmatprep.subr.bf16.mxu0 0
    %1102 = vmatpush2.bf16.msra.mxu0 %v888
    %1103 = vmatprep.subr.bf16.mxu0 0
    %1104 = vmatpush2.bf16.msra.mxu0 %v887
    %1105 = vmatprep.subr.bf16.mxu0 0
    %1106 = vmatpush2.bf16.msra.mxu0 %v886
    %1107 = vmatprep.subr.bf16.mxu0 0
    %1108 = vmatpush2.bf16.msra.mxu0 %v885
    %1109 = vmatprep.subr.bf16.mxu0 0
    %1110 = vmatpush2.bf16.msra.mxu0 %v884
    %1111 = vmatprep.subr.bf16.mxu0 0
    %1112 = vmatpush2.bf16.msra.mxu0 %v883
    %1113 = vmatprep.subr.bf16.mxu0 0
    %1114 = vmatpush2.bf16.msra.mxu0 %v882
    %1115 = vmatprep.mubr.bf16.mxu0 %v477
    %1116 = vmatmul.mubr.bf16.gmra.mxu0 %v476
    %v1117 = vpop.f32.mrf.mxu0
    %v1118 = vadd.f32 %v1021, %v1117
    %v1119 = vpop.f32.mrf.mxu0
    %v1120 = vpop.f32.mrf.mxu0
    %v1121 = vadd.f32 %v1024, %v1120
    %v1122 = vpop.f32.mrf.mxu0
    %1123 = vmatprep.mubr.bf16.mxu0 %v485
    %1124 = vmatmul.mubr.bf16.gmra.mxu0 %v484
    %v1125 = vpop.f32.mrf.mxu0
    %v1126 = vadd.f32 %v1029, %v1125
    %v1127 = vpop.f32.mrf.mxu0
    %v1128 = vpop.f32.mrf.mxu0
    %v1129 = vadd.f32 %v1032, %v1128
    %v1130 = vpop.f32.mrf.mxu0
    %1131 = vmatprep.mubr.bf16.mxu0 %v493
    %1132 = vmatmul.mubr.bf16.gmra.mxu0 %v492
    %v1133 = vpop.f32.mrf.mxu0
    %v1134 = vadd.f32 %v1037, %v1133
    %v1135 = vpop.f32.mrf.mxu0
    %v1136 = vpop.f32.mrf.mxu0
    %v1137 = vadd.f32 %v1040, %v1136
    %v1138 = vpop.f32.mrf.mxu0
    %1139 = vmatprep.mubr.bf16.mxu0 %v501
    %1140 = vmatmul.mubr.bf16.gmra.mxu0 %v500
    %v1141 = vpop.f32.mrf.mxu0
    %v1142 = vadd.f32 %v1045, %v1141
    %v1143 = vpop.f32.mrf.mxu0
    %v1144 = vpop.f32.mrf.mxu0
    %v1145 = vadd.f32 %v1048, %v1144
    %v1146 = vpop.f32.mrf.mxu0
    %1147 = vmatprep.mubr.bf16.mxu0 %v509
    %1148 = vmatmul.mubr.bf16.gmra.mxu0 %v508
    %v1149 = vpop.f32.mrf.mxu0
    %v1150 = vadd.f32 %v1053, %v1149
    %v1151 = vpop.f32.mrf.mxu0
    %v1152 = vpop.f32.mrf.mxu0
    %v1153 = vadd.f32 %v1056, %v1152
    %v1154 = vpop.f32.mrf.mxu0
    %1155 = vmatprep.mubr.bf16.mxu0 %v517
    %1156 = vmatmul.mubr.bf16.gmra.mxu0 %v516
    %v1157 = vpop.f32.mrf.mxu0
    %v1158 = vadd.f32 %v1061, %v1157
    %v1159 = vpop.f32.mrf.mxu0
    %v1160 = vpop.f32.mrf.mxu0
    %v1161 = vadd.f32 %v1064, %v1160
    %v1162 = vpop.f32.mrf.mxu0
    %1163 = vmatprep.mubr.bf16.mxu0 %v525
    %1164 = vmatmul.mubr.bf16.gmra.mxu0 %v524
    %v1165 = vpop.f32.mrf.mxu0
    %v1166 = vadd.f32 %v1069, %v1165
    %v1167 = vpop.f32.mrf.mxu0
    %v1168 = vpop.f32.mrf.mxu0
    %v1169 = vadd.f32 %v1072, %v1168
    %v1170 = vpop.f32.mrf.mxu0
    %1171 = vmatprep.mubr.bf16.mxu0 %v533
    %1172 = vmatmul.mubr.bf16.gmra.mxu0 %v532
    %v1173 = vpop.f32.mrf.mxu0
    %v1174 = vadd.f32 %v1077, %v1173
    %v1175 = vpop.f32.mrf.mxu0
    %v1176 = vpop.f32.mrf.mxu0
    %v1177 = vadd.f32 %v1080, %v1176
    %v1178 = vpop.f32.mrf.mxu0
    %1179 = vdwg.mxu0
    %1180 = vmatprep.subr.bf16.mxu0 0
    %1181 = vmatpush1.bf16.msra.mxu0 %v897
    %1182 = vmatprep.subr.bf16.mxu0 0
    %1183 = vmatpush1.bf16.msra.mxu0 %v896
    %1184 = vmatprep.subr.bf16.mxu0 0
    %1185 = vmatpush1.bf16.msra.mxu0 %v895
    %1186 = vmatprep.subr.bf16.mxu0 0
    %1187 = vmatpush1.bf16.msra.mxu0 %v894
    %1188 = vmatprep.subr.bf16.mxu0 0
    %1189 = vmatpush1.bf16.msra.mxu0 %v893
    %1190 = vmatprep.subr.bf16.mxu0 0
    %1191 = vmatpush1.bf16.msra.mxu0 %v892
    %1192 = vmatprep.subr.bf16.mxu0 0
    %1193 = vmatpush1.bf16.msra.mxu0 %v891
    %1194 = vmatprep.subr.bf16.mxu0 0
    %1195 = vmatpush1.bf16.msra.mxu0 %v890
    %1196 = vmatprep.subr.bf16.mxu0 0
    %1197 = vmatpush2.bf16.msra.mxu0 %v905
    %1198 = vmatprep.subr.bf16.mxu0 0
    %1199 = vmatpush2.bf16.msra.mxu0 %v904
    %1200 = vmatprep.subr.bf16.mxu0 0
    %1201 = vmatpush2.bf16.msra.mxu0 %v903
    %1202 = vmatprep.subr.bf16.mxu0 0
    %1203 = vmatpush2.bf16.msra.mxu0 %v902
    %1204 = vmatprep.subr.bf16.mxu0 0
    %1205 = vmatpush2.bf16.msra.mxu0 %v901
    %1206 = vmatprep.subr.bf16.mxu0 0
    %1207 = vmatpush2.bf16.msra.mxu0 %v900
    %1208 = vmatprep.subr.bf16.mxu0 0
    %1209 = vmatpush2.bf16.msra.mxu0 %v899
    %1210 = vmatprep.subr.bf16.mxu0 0
    %1211 = vmatpush2.bf16.msra.mxu0 %v898
    %1212 = vmatprep.mubr.bf16.mxu0 %v479
    %1213 = vmatmul.mubr.bf16.gmra.mxu0 %v478
    %v1214 = vpop.f32.mrf.mxu0
    %v1215 = vadd.f32 %v1118, %v1214
    %v1216 = vpop.f32.mrf.mxu0
    %v1217 = vpop.f32.mrf.mxu0
    %v1218 = vadd.f32 %v1121, %v1217
    %v1219 = vpop.f32.mrf.mxu0
    %1220 = vmatprep.mubr.bf16.mxu0 %v487
    %1221 = vmatmul.mubr.bf16.gmra.mxu0 %v486
    %v1222 = vpop.f32.mrf.mxu0
    %v1223 = vadd.f32 %v1126, %v1222
    %v1224 = vpop.f32.mrf.mxu0
    %v1225 = vpop.f32.mrf.mxu0
    %v1226 = vadd.f32 %v1129, %v1225
    %v1227 = vpop.f32.mrf.mxu0
    %1228 = vmatprep.mubr.bf16.mxu0 %v495
    %1229 = vmatmul.mubr.bf16.gmra.mxu0 %v494
    %v1230 = vpop.f32.mrf.mxu0
    %v1231 = vadd.f32 %v1134, %v1230
    %v1232 = vpop.f32.mrf.mxu0
    %v1233 = vpop.f32.mrf.mxu0
    %v1234 = vadd.f32 %v1137, %v1233
    %v1235 = vpop.f32.mrf.mxu0
    %1236 = vmatprep.mubr.bf16.mxu0 %v503
    %1237 = vmatmul.mubr.bf16.gmra.mxu0 %v502
    %v1238 = vpop.f32.mrf.mxu0
    %v1239 = vadd.f32 %v1142, %v1238
    %v1240 = vpop.f32.mrf.mxu0
    %v1241 = vpop.f32.mrf.mxu0
    %v1242 = vadd.f32 %v1145, %v1241
    %v1243 = vpop.f32.mrf.mxu0
    %1244 = vmatprep.mubr.bf16.mxu0 %v511
    %1245 = vmatmul.mubr.bf16.gmra.mxu0 %v510
    %v1246 = vpop.f32.mrf.mxu0
    %v1247 = vadd.f32 %v1150, %v1246
    %v1248 = vpop.f32.mrf.mxu0
    %v1249 = vpop.f32.mrf.mxu0
    %v1250 = vadd.f32 %v1153, %v1249
    %v1251 = vpop.f32.mrf.mxu0
    %1252 = vmatprep.mubr.bf16.mxu0 %v519
    %1253 = vmatmul.mubr.bf16.gmra.mxu0 %v518
    %v1254 = vpop.f32.mrf.mxu0
    %v1255 = vadd.f32 %v1158, %v1254
    %v1256 = vpop.f32.mrf.mxu0
    %v1257 = vpop.f32.mrf.mxu0
    %v1258 = vadd.f32 %v1161, %v1257
    %v1259 = vpop.f32.mrf.mxu0
    %1260 = vmatprep.mubr.bf16.mxu0 %v527
    %1261 = vmatmul.mubr.bf16.gmra.mxu0 %v526
    %v1262 = vpop.f32.mrf.mxu0
    %v1263 = vadd.f32 %v1166, %v1262
    %v1264 = vpop.f32.mrf.mxu0
    %v1265 = vpop.f32.mrf.mxu0
    %v1266 = vadd.f32 %v1169, %v1265
    %v1267 = vpop.f32.mrf.mxu0
    %1268 = vmatprep.mubr.bf16.mxu0 %v535
    %1269 = vmatmul.mubr.bf16.gmra.mxu0 %v534
    %v1270 = vpop.f32.mrf.mxu0
    %v1271 = vadd.f32 %v1174, %v1270
    %v1272 = vpop.f32.mrf.mxu0
    %v1273 = vpop.f32.mrf.mxu0
    %v1274 = vadd.f32 %v1177, %v1273
    %v1275 = vpop.f32.mrf.mxu0
    %1276 = vdwg.mxu0
    %1277 = vmatprep.subr.bf16.mxu0 0
    %1278 = vmatpush1.bf16.msra.mxu0 %v913
    %1279 = vmatprep.subr.bf16.mxu0 0
    %1280 = vmatpush1.bf16.msra.mxu0 %v912
    %1281 = vmatprep.subr.bf16.mxu0 0
    %1282 = vmatpush1.bf16.msra.mxu0 %v911
    %1283 = vmatprep.subr.bf16.mxu0 0
    %1284 = vmatpush1.bf16.msra.mxu0 %v910
    %1285 = vmatprep.subr.bf16.mxu0 0
    %1286 = vmatpush1.bf16.msra.mxu0 %v909
    %1287 = vmatprep.subr.bf16.mxu0 0
    %1288 = vmatpush1.bf16.msra.mxu0 %v908
    %1289 = vmatprep.subr.bf16.mxu0 0
    %1290 = vmatpush1.bf16.msra.mxu0 %v907
    %1291 = vmatprep.subr.bf16.mxu0 0
    %1292 = vmatpush1.bf16.msra.mxu0 %v906
    %1293 = vmatprep.subr.bf16.mxu0 0
    %1294 = vmatpush2.bf16.msra.mxu0 %v921
    %1295 = vmatprep.subr.bf16.mxu0 0
    %1296 = vmatpush2.bf16.msra.mxu0 %v920
    %1297 = vmatprep.subr.bf16.mxu0 0
    %1298 = vmatpush2.bf16.msra.mxu0 %v919
    %1299 = vmatprep.subr.bf16.mxu0 0
    %1300 = vmatpush2.bf16.msra.mxu0 %v918
    %1301 = vmatprep.subr.bf16.mxu0 0
    %1302 = vmatpush2.bf16.msra.mxu0 %v917
    %1303 = vmatprep.subr.bf16.mxu0 0
    %1304 = vmatpush2.bf16.msra.mxu0 %v916
    %1305 = vmatprep.subr.bf16.mxu0 0
    %1306 = vmatpush2.bf16.msra.mxu0 %v915
    %1307 = vmatprep.subr.bf16.mxu0 0
    %1308 = vmatpush2.bf16.msra.mxu0 %v914
    %1309 = vmatprep.mubr.bf16.mxu0 %v481
    %1310 = vmatmul.mubr.bf16.gmra.mxu0 %v480
    %v1311 = vpop.f32.mrf.mxu0
    %v1312 = vadd.f32 %v1215, %v1311
    %v1313 = vpop.f32.mrf.mxu0
    %v1314 = vpop.f32.mrf.mxu0
    %v1315 = vadd.f32 %v1218, %v1314
    %v1316 = vpop.f32.mrf.mxu0
    %1317 = vmatprep.mubr.bf16.mxu0 %v489
    %1318 = vmatmul.mubr.bf16.gmra.mxu0 %v488
    %v1319 = vpop.f32.mrf.mxu0
    %v1320 = vadd.f32 %v1223, %v1319
    %v1321 = vpop.f32.mrf.mxu0
    %v1322 = vpop.f32.mrf.mxu0
    %v1323 = vadd.f32 %v1226, %v1322
    %v1324 = vpop.f32.mrf.mxu0
    %1325 = vmatprep.mubr.bf16.mxu0 %v497
    %1326 = vmatmul.mubr.bf16.gmra.mxu0 %v496
    %v1327 = vpop.f32.mrf.mxu0
    %v1328 = vadd.f32 %v1231, %v1327
    %v1329 = vpop.f32.mrf.mxu0
    %v1330 = vpop.f32.mrf.mxu0
    %v1331 = vadd.f32 %v1234, %v1330
    %v1332 = vpop.f32.mrf.mxu0
    %1333 = vmatprep.mubr.bf16.mxu0 %v505
    %1334 = vmatmul.mubr.bf16.gmra.mxu0 %v504
    %v1335 = vpop.f32.mrf.mxu0
    %v1336 = vadd.f32 %v1239, %v1335
    %v1337 = vpop.f32.mrf.mxu0
    %v1338 = vpop.f32.mrf.mxu0
    %v1339 = vadd.f32 %v1242, %v1338
    %v1340 = vpop.f32.mrf.mxu0
    %1341 = vmatprep.mubr.bf16.mxu0 %v513
    %1342 = vmatmul.mubr.bf16.gmra.mxu0 %v512
    %v1343 = vpop.f32.mrf.mxu0
    %v1344 = vadd.f32 %v1247, %v1343
    %v1345 = vpop.f32.mrf.mxu0
    %v1346 = vpop.f32.mrf.mxu0
    %v1347 = vadd.f32 %v1250, %v1346
    %v1348 = vpop.f32.mrf.mxu0
    %1349 = vmatprep.mubr.bf16.mxu0 %v521
    %1350 = vmatmul.mubr.bf16.gmra.mxu0 %v520
    %v1351 = vpop.f32.mrf.mxu0
    %v1352 = vadd.f32 %v1255, %v1351
    %v1353 = vpop.f32.mrf.mxu0
    %v1354 = vpop.f32.mrf.mxu0
    %v1355 = vadd.f32 %v1258, %v1354
    %v1356 = vpop.f32.mrf.mxu0
    %1357 = vmatprep.mubr.bf16.mxu0 %v529
    %1358 = vmatmul.mubr.bf16.gmra.mxu0 %v528
    %v1359 = vpop.f32.mrf.mxu0
    %v1360 = vadd.f32 %v1263, %v1359
    %v1361 = vpop.f32.mrf.mxu0
    %v1362 = vpop.f32.mrf.mxu0
    %v1363 = vadd.f32 %v1266, %v1362
    %v1364 = vpop.f32.mrf.mxu0
    %1365 = vmatprep.mubr.bf16.mxu0 %v537
    %1366 = vmatmul.mubr.bf16.gmra.mxu0 %v536
    %v1367 = vpop.f32.mrf.mxu0
    %v1368 = vadd.f32 %v1271, %v1367
    %v1369 = vpop.f32.mrf.mxu0
    %v1370 = vpop.f32.mrf.mxu0
    %v1371 = vadd.f32 %v1274, %v1370
    %v1372 = vpop.f32.mrf.mxu0
    %1373 = vdwg.mxu0
    %v1374 = vmax.f32 %v1312, 0.0
    %v1375 = vmax.f32 %v1315, 0.0
    %v1376 = vmax.f32 %v1320, 0.0
    %v1377 = vmax.f32 %v1323, 0.0
    %v1378 = vmax.f32 %v1328, 0.0
    %v1379 = vmax.f32 %v1331, 0.0
    %v1380 = vmax.f32 %v1336, 0.0
    %v1381 = vmax.f32 %v1339, 0.0
    %v1382 = vmax.f32 %v1344, 0.0
    %v1383 = vmax.f32 %v1347, 0.0
    %v1384 = vmax.f32 %v1352, 0.0
    %v1385 = vmax.f32 %v1355, 0.0
    %v1386 = vmax.f32 %v1360, 0.0
    %v1387 = vmax.f32 %v1363, 0.0
    %v1388 = vmax.f32 %v1368, 0.0
    %v1389 = vmax.f32 %v1371, 0.0
    %v1390 = vpack.c.bf16 %v1375, %v1374
    %v1391 = vpack.c.bf16 %v1377, %v1376
    %v1392 = vpack.c.bf16 %v1379, %v1378
    %v1393 = vpack.c.bf16 %v1381, %v1380
    %v1394 = vpack.c.bf16 %v1383, %v1382
    %v1395 = vpack.c.bf16 %v1385, %v1384
    %v1396 = vpack.c.bf16 %v1387, %v1386
    %v1397 = vpack.c.bf16 %v1389, %v1388
    %v1398 = vld [vmem:[#allocation7] sm:$0xf]
    %v1399 = vld [vmem:[#allocation7 + $0x4] sm:$0xf]
    %v1400 = vld [vmem:[#allocation7 + $0x8] sm:$0xf]
    %v1401 = vld [vmem:[#allocation7 + $0xc] sm:$0xf]
    %v1402 = vld [vmem:[#allocation7 + $0x10] sm:$0xf]
    %v1403 = vld [vmem:[#allocation7 + $0x14] sm:$0xf]
    %v1404 = vld [vmem:[#allocation7 + $0x18] sm:$0xf]
    %v1405 = vld [vmem:[#allocation7 + $0x1c] sm:$0xf]
    %v1406 = vld [vmem:[#allocation7 + $0x20] sm:$0xf]
    %v1407 = vld [vmem:[#allocation7 + $0x24] sm:$0xf]
    %v1408 = vld [vmem:[#allocation7 + $0x28] sm:$0xf]
    %v1409 = vld [vmem:[#allocation7 + $0x2c] sm:$0xf]
    %v1410 = vld [vmem:[#allocation7 + $0x30] sm:$0xf]
    %v1411 = vld [vmem:[#allocation7 + $0x34] sm:$0xf]
    %v1412 = vld [vmem:[#allocation7 + $0x38] sm:$0xf]
    %v1413 = vld [vmem:[#allocation7 + $0x3c] sm:$0xf]
    %v1414 = vld [vmem:[%s4] sm:$0x1]
    %v1416 = vlaneseq
    %v1417 = vshrl.u32 %v1416, 7
    %v1418 = vsub.s32 0, %v1417
    %v1419 = vrot.slane %v1414, %v1418
    %v1437 = vunpack.c.l.b16 %v1398
    %v1438 = vunpack.c.l.b16 %v1399
    %v1439 = vunpack.c.l.b16 %v1400
    %v1440 = vunpack.c.l.b16 %v1401
    %v1441 = vunpack.c.l.b16 %v1402
    %v1442 = vunpack.c.l.b16 %v1403
    %v1443 = vunpack.c.l.b16 %v1404
    %v1444 = vunpack.c.l.b16 %v1405
    %v1445 = vunpack.c.l.b16 %v1406
    %v1446 = vunpack.c.l.b16 %v1407
    %v1447 = vunpack.c.l.b16 %v1408
    %v1448 = vunpack.c.l.b16 %v1409
    %v1449 = vunpack.c.l.b16 %v1410
    %v1450 = vunpack.c.l.b16 %v1411
    %v1451 = vunpack.c.l.b16 %v1412
    %v1452 = vunpack.c.l.b16 %v1413
    %v1453 = vpack.c.b16 %v1438, %v1437
    %v1454 = vpack.c.b16 %v1440, %v1439
    %v1455 = vpack.c.b16 %v1442, %v1441
    %v1456 = vpack.c.b16 %v1444, %v1443
    %v1457 = vpack.c.b16 %v1446, %v1445
    %v1458 = vpack.c.b16 %v1448, %v1447
    %v1459 = vpack.c.b16 %v1450, %v1449
    %v1460 = vpack.c.b16 %v1452, %v1451
    %1469 = vmatprep.subr.bf16.mxu0 0
    %1470 = vmatpush1.bf16.msra.mxu0 %v1460
    %1471 = vmatprep.subr.bf16.mxu0 0
    %1472 = vmatpush1.bf16.msra.mxu0 %v1459
    %1473 = vmatprep.subr.bf16.mxu0 0
    %1474 = vmatpush1.bf16.msra.mxu0 %v1458
    %1475 = vmatprep.subr.bf16.mxu0 0
    %1476 = vmatpush1.bf16.msra.mxu0 %v1457
    %1477 = vmatprep.subr.bf16.mxu0 0
    %1478 = vmatpush1.bf16.msra.mxu0 %v1456
    %1479 = vmatprep.subr.bf16.mxu0 0
    %1480 = vmatpush1.bf16.msra.mxu0 %v1455
    %1481 = vmatprep.subr.bf16.mxu0 0
    %1482 = vmatpush1.bf16.msra.mxu0 %v1454
    %1483 = vmatprep.subr.bf16.mxu0 0
    %1484 = vmatpush1.bf16.msra.mxu0 %v1453
    %1485 = vmatprep.subr.bf16.mxu0 0
    %1486 = vmatpush2.bf16.msra.mxu0 0
    %1487 = vmatprep.subr.bf16.mxu0 0
    %1488 = vmatpush2.bf16.msra.mxu0 0
    %1489 = vmatprep.subr.bf16.mxu0 0
    %1490 = vmatpush2.bf16.msra.mxu0 0
    %1491 = vmatprep.subr.bf16.mxu0 0
    %1492 = vmatpush2.bf16.msra.mxu0 0
    %1493 = vmatprep.subr.bf16.mxu0 0
    %1494 = vmatpush2.bf16.msra.mxu0 0
    %1495 = vmatprep.subr.bf16.mxu0 0
    %1496 = vmatpush2.bf16.msra.mxu0 0
    %1497 = vmatprep.subr.bf16.mxu0 0
    %1498 = vmatpush2.bf16.msra.mxu0 0
    %1499 = vmatprep.subr.bf16.mxu0 0
    %1500 = vmatpush2.bf16.msra.mxu0 0
    %1501 = vmatprep.mubr.bf16.mxu0 0
    %1502 = vmatmul.mubr.bf16.gmra.mxu0 %v1390
    %v1503 = vpop.f32.mrf.mxu0
    %v1504 = vadd.f32 %v1419, %v1503
    %v1505 = vpop.f32.mrf.mxu0
    %v1506 = vpop.f32.mrf.mxu0
    %v1507 = vadd.f32 %v1419, %v1506
    %v1508 = vpop.f32.mrf.mxu0
    %1509 = vmatprep.mubr.bf16.mxu0 0
    %1510 = vmatmul.mubr.bf16.gmra.mxu0 %v1391
    %v1511 = vpop.f32.mrf.mxu0
    %v1512 = vadd.f32 %v1419, %v1511
    %v1513 = vpop.f32.mrf.mxu0
    %v1514 = vpop.f32.mrf.mxu0
    %v1515 = vadd.f32 %v1419, %v1514
    %v1516 = vpop.f32.mrf.mxu0
    %1517 = vmatprep.mubr.bf16.mxu0 0
    %1518 = vmatmul.mubr.bf16.gmra.mxu0 %v1392
    %v1519 = vpop.f32.mrf.mxu0
    %v1520 = vadd.f32 %v1419, %v1519
    %v1521 = vpop.f32.mrf.mxu0
    %v1522 = vpop.f32.mrf.mxu0
    %v1523 = vadd.f32 %v1419, %v1522
    %v1524 = vpop.f32.mrf.mxu0
    %1525 = vmatprep.mubr.bf16.mxu0 0
    %1526 = vmatmul.mubr.bf16.gmra.mxu0 %v1393
    %v1527 = vpop.f32.mrf.mxu0
    %v1528 = vadd.f32 %v1419, %v1527
    %v1529 = vpop.f32.mrf.mxu0
    %v1530 = vpop.f32.mrf.mxu0
    %v1531 = vadd.f32 %v1419, %v1530
    %v1532 = vpop.f32.mrf.mxu0
    %1533 = vmatprep.mubr.bf16.mxu0 0
    %1534 = vmatmul.mubr.bf16.gmra.mxu0 %v1394
    %v1535 = vpop.f32.mrf.mxu0
    %v1536 = vadd.f32 %v1419, %v1535
    %v1537 = vpop.f32.mrf.mxu0
    %v1538 = vpop.f32.mrf.mxu0
    %v1539 = vadd.f32 %v1419, %v1538
    %v1540 = vpop.f32.mrf.mxu0
    %1541 = vmatprep.mubr.bf16.mxu0 0
    %1542 = vmatmul.mubr.bf16.gmra.mxu0 %v1395
    %v1543 = vpop.f32.mrf.mxu0
    %v1544 = vadd.f32 %v1419, %v1543
    %v1545 = vpop.f32.mrf.mxu0
    %v1546 = vpop.f32.mrf.mxu0
    %v1547 = vadd.f32 %v1419, %v1546
    %v1548 = vpop.f32.mrf.mxu0
    %1549 = vmatprep.mubr.bf16.mxu0 0
    %1550 = vmatmul.mubr.bf16.gmra.mxu0 %v1396
    %v1551 = vpop.f32.mrf.mxu0
    %v1552 = vadd.f32 %v1419, %v1551
    %v1553 = vpop.f32.mrf.mxu0
    %v1554 = vpop.f32.mrf.mxu0
    %v1555 = vadd.f32 %v1419, %v1554
    %v1556 = vpop.f32.mrf.mxu0
    %1557 = vmatprep.mubr.bf16.mxu0 0
    %1558 = vmatmul.mubr.bf16.gmra.mxu0 %v1397
    %v1559 = vpop.f32.mrf.mxu0
    %v1560 = vadd.f32 %v1419, %v1559
    %v1561 = vpop.f32.mrf.mxu0
    %v1562 = vpop.f32.mrf.mxu0
    %v1563 = vadd.f32 %v1419, %v1562
    %v1564 = vpop.f32.mrf.mxu0
    %1565 = vdwg.mxu0
    %v1566 = vmax.f32 %v1504, 0.0
    %v1567 = vmax.f32 %v1507, 0.0
    %v1568 = vmax.f32 %v1512, 0.0
    %v1569 = vmax.f32 %v1515, 0.0
    %v1570 = vmax.f32 %v1520, 0.0
    %v1571 = vmax.f32 %v1523, 0.0
    %v1572 = vmax.f32 %v1528, 0.0
    %v1573 = vmax.f32 %v1531, 0.0
    %v1574 = vmax.f32 %v1536, 0.0
    %v1575 = vmax.f32 %v1539, 0.0
    %v1576 = vmax.f32 %v1544, 0.0
    %v1577 = vmax.f32 %v1547, 0.0
    %v1578 = vmax.f32 %v1552, 0.0
    %v1579 = vmax.f32 %v1555, 0.0
    %v1580 = vmax.f32 %v1560, 0.0
    %v1581 = vmax.f32 %v1563, 0.0
    %v1582 = vpack.c.bf16 %v1567, %v1566
    %v1583 = vpack.c.bf16 %v1569, %v1568
    %v1584 = vpack.c.bf16 %v1571, %v1570
    %v1585 = vpack.c.bf16 %v1573, %v1572
    %v1586 = vpack.c.bf16 %v1575, %v1574
    %v1587 = vpack.c.bf16 %v1577, %v1576
    %v1588 = vpack.c.bf16 %v1579, %v1578
    %v1589 = vpack.c.bf16 %v1581, %v1580
    %v1590 = vld [vmem:[#allocation8] sm:$0xf]
    %v1591 = vld [vmem:[#allocation8 + $0x4] sm:$0xf]
    %v1592 = vld [vmem:[#allocation8 + $0x8] sm:$0xf]
    %v1593 = vld [vmem:[#allocation8 + $0xc] sm:$0xf]
    %v1594 = vld [vmem:[#allocation8 + $0x10] sm:$0xf]
    %v1595 = vld [vmem:[#allocation8 + $0x14] sm:$0xf]
    %v1596 = vld [vmem:[#allocation8 + $0x18] sm:$0xf]
    %v1597 = vld [vmem:[#allocation8 + $0x1c] sm:$0xf]
    %v1598 = vld [vmem:[#allocation8 + $0x20] sm:$0xf]
    %v1599 = vld [vmem:[#allocation8 + $0x24] sm:$0xf]
    %v1600 = vld [vmem:[#allocation8 + $0x28] sm:$0xf]
    %v1601 = vld [vmem:[#allocation8 + $0x2c] sm:$0xf]
    %v1602 = vld [vmem:[#allocation8 + $0x30] sm:$0xf]
    %v1603 = vld [vmem:[#allocation8 + $0x34] sm:$0xf]
    %v1604 = vld [vmem:[#allocation8 + $0x38] sm:$0xf]
    %v1605 = vld [vmem:[#allocation8 + $0x3c] sm:$0xf]
    %v1606 = vld [vmem:[%s6] sm:$0x1]
    %v1608 = vlaneseq
    %v1609 = vshrl.u32 %v1608, 7
    %v1610 = vsub.s32 0, %v1609
    %v1611 = vrot.slane %v1606, %v1610
    %v1629 = vunpack.c.l.b16 %v1590
    %v1630 = vunpack.c.l.b16 %v1591
    %v1631 = vunpack.c.l.b16 %v1592
    %v1632 = vunpack.c.l.b16 %v1593
    %v1633 = vunpack.c.l.b16 %v1594
    %v1634 = vunpack.c.l.b16 %v1595
    %v1635 = vunpack.c.l.b16 %v1596
    %v1636 = vunpack.c.l.b16 %v1597
    %v1637 = vunpack.c.l.b16 %v1598
    %v1638 = vunpack.c.l.b16 %v1599
    %v1639 = vunpack.c.l.b16 %v1600
    %v1640 = vunpack.c.l.b16 %v1601
    %v1641 = vunpack.c.l.b16 %v1602
    %v1642 = vunpack.c.l.b16 %v1603
    %v1643 = vunpack.c.l.b16 %v1604
    %v1644 = vunpack.c.l.b16 %v1605
    %v1645 = vpack.c.b16 %v1630, %v1629
    %v1646 = vpack.c.b16 %v1632, %v1631
    %v1647 = vpack.c.b16 %v1634, %v1633
    %v1648 = vpack.c.b16 %v1636, %v1635
    %v1649 = vpack.c.b16 %v1638, %v1637
    %v1650 = vpack.c.b16 %v1640, %v1639
    %v1651 = vpack.c.b16 %v1642, %v1641
    %v1652 = vpack.c.b16 %v1644, %v1643
    %1661 = vmatprep.subr.bf16.mxu0 0
    %1662 = vmatpush1.bf16.msra.mxu0 %v1652
    %1663 = vmatprep.subr.bf16.mxu0 0
    %1664 = vmatpush1.bf16.msra.mxu0 %v1651
    %1665 = vmatprep.subr.bf16.mxu0 0
    %1666 = vmatpush1.bf16.msra.mxu0 %v1650
    %1667 = vmatprep.subr.bf16.mxu0 0
    %1668 = vmatpush1.bf16.msra.mxu0 %v1649
    %1669 = vmatprep.subr.bf16.mxu0 0
    %1670 = vmatpush1.bf16.msra.mxu0 %v1648
    %1671 = vmatprep.subr.bf16.mxu0 0
    %1672 = vmatpush1.bf16.msra.mxu0 %v1647
    %1673 = vmatprep.subr.bf16.mxu0 0
    %1674 = vmatpush1.bf16.msra.mxu0 %v1646
    %1675 = vmatprep.subr.bf16.mxu0 0
    %1676 = vmatpush1.bf16.msra.mxu0 %v1645
    %1677 = vmatprep.subr.bf16.mxu0 0
    %1678 = vmatpush2.bf16.msra.mxu0 0
    %1679 = vmatprep.subr.bf16.mxu0 0
    %1680 = vmatpush2.bf16.msra.mxu0 0
    %1681 = vmatprep.subr.bf16.mxu0 0
    %1682 = vmatpush2.bf16.msra.mxu0 0
    %1683 = vmatprep.subr.bf16.mxu0 0
    %1684 = vmatpush2.bf16.msra.mxu0 0
    %1685 = vmatprep.subr.bf16.mxu0 0
    %1686 = vmatpush2.bf16.msra.mxu0 0
    %1687 = vmatprep.subr.bf16.mxu0 0
    %1688 = vmatpush2.bf16.msra.mxu0 0
    %1689 = vmatprep.subr.bf16.mxu0 0
    %1690 = vmatpush2.bf16.msra.mxu0 0
    %1691 = vmatprep.subr.bf16.mxu0 0
    %1692 = vmatpush2.bf16.msra.mxu0 0
    %1693 = vmatprep.mubr.bf16.mxu0 0
    %1694 = vmatmul.mubr.bf16.gmra.mxu0 %v1582
    %v1695 = vpop.f32.mrf.mxu0
    %v1696 = vadd.f32 %v1611, %v1695
    %v1697 = vpop.f32.mrf.mxu0
    %v1698 = vpop.f32.mrf.mxu0
    %v1699 = vadd.f32 %v1611, %v1698
    %v1700 = vpop.f32.mrf.mxu0
    %1701 = vmatprep.mubr.bf16.mxu0 0
    %1702 = vmatmul.mubr.bf16.gmra.mxu0 %v1583
    %v1703 = vpop.f32.mrf.mxu0
    %v1704 = vadd.f32 %v1611, %v1703
    %v1705 = vpop.f32.mrf.mxu0
    %v1706 = vpop.f32.mrf.mxu0
    %v1707 = vadd.f32 %v1611, %v1706
    %v1708 = vpop.f32.mrf.mxu0
    %1709 = vmatprep.mubr.bf16.mxu0 0
    %1710 = vmatmul.mubr.bf16.gmra.mxu0 %v1584
    %v1711 = vpop.f32.mrf.mxu0
    %v1712 = vadd.f32 %v1611, %v1711
    %v1713 = vpop.f32.mrf.mxu0
    %v1714 = vpop.f32.mrf.mxu0
    %v1715 = vadd.f32 %v1611, %v1714
    %v1716 = vpop.f32.mrf.mxu0
    %1717 = vmatprep.mubr.bf16.mxu0 0
    %1718 = vmatmul.mubr.bf16.gmra.mxu0 %v1585
    %v1719 = vpop.f32.mrf.mxu0
    %v1720 = vadd.f32 %v1611, %v1719
    %v1721 = vpop.f32.mrf.mxu0
    %v1722 = vpop.f32.mrf.mxu0
    %v1723 = vadd.f32 %v1611, %v1722
    %v1724 = vpop.f32.mrf.mxu0
    %1725 = vmatprep.mubr.bf16.mxu0 0
    %1726 = vmatmul.mubr.bf16.gmra.mxu0 %v1586
    %v1727 = vpop.f32.mrf.mxu0
    %v1728 = vadd.f32 %v1611, %v1727
    %v1729 = vpop.f32.mrf.mxu0
    %v1730 = vpop.f32.mrf.mxu0
    %v1731 = vadd.f32 %v1611, %v1730
    %v1732 = vpop.f32.mrf.mxu0
    %1733 = vmatprep.mubr.bf16.mxu0 0
    %1734 = vmatmul.mubr.bf16.gmra.mxu0 %v1587
    %v1735 = vpop.f32.mrf.mxu0
    %v1736 = vadd.f32 %v1611, %v1735
    %v1737 = vpop.f32.mrf.mxu0
    %v1738 = vpop.f32.mrf.mxu0
    %v1739 = vadd.f32 %v1611, %v1738
    %v1740 = vpop.f32.mrf.mxu0
    %1741 = vmatprep.mubr.bf16.mxu0 0
    %1742 = vmatmul.mubr.bf16.gmra.mxu0 %v1588
    %v1743 = vpop.f32.mrf.mxu0
    %v1744 = vadd.f32 %v1611, %v1743
    %v1745 = vpop.f32.mrf.mxu0
    %v1746 = vpop.f32.mrf.mxu0
    %v1747 = vadd.f32 %v1611, %v1746
    %v1748 = vpop.f32.mrf.mxu0
    %1749 = vmatprep.mubr.bf16.mxu0 0
    %1750 = vmatmul.mubr.bf16.gmra.mxu0 %v1589
    %v1751 = vpop.f32.mrf.mxu0
    %v1752 = vadd.f32 %v1611, %v1751
    %v1753 = vpop.f32.mrf.mxu0
    %v1754 = vpop.f32.mrf.mxu0
    %v1755 = vadd.f32 %v1611, %v1754
    %v1756 = vpop.f32.mrf.mxu0
    %1757 = vdwg.mxu0
    %v1758 = vlaneseq
    %v1759 = vand.u32 %v1758, 127
    %vm1760 = vcmp.lt.s32.totalorder %v1759, 10
    %v1761 = vsel %vm1760, %v1696, -3.4028235e+38
    %v1762 = vsel %vm1760, %v1699, -3.4028235e+38
    %v1763 = vsel %vm1760, %v1704, -3.4028235e+38
    %v1764 = vsel %vm1760, %v1707, -3.4028235e+38
    %v1765 = vsel %vm1760, %v1712, -3.4028235e+38
    %v1766 = vsel %vm1760, %v1715, -3.4028235e+38
    %v1767 = vsel %vm1760, %v1720, -3.4028235e+38
    %v1768 = vsel %vm1760, %v1723, -3.4028235e+38
    %v1769 = vsel %vm1760, %v1728, -3.4028235e+38
    %v1770 = vsel %vm1760, %v1731, -3.4028235e+38
    %v1771 = vsel %vm1760, %v1736, -3.4028235e+38
    %v1772 = vsel %vm1760, %v1739, -3.4028235e+38
    %v1773 = vsel %vm1760, %v1744, -3.4028235e+38
    %v1774 = vsel %vm1760, %v1747, -3.4028235e+38
    %v1775 = vsel %vm1760, %v1752, -3.4028235e+38
    %v1776 = vsel %vm1760, %v1755, -3.4028235e+38
    %1777 = vmax.xlane.f32.xlu0 %v1761
    %v1778 = vpop.xlane.xlu0 %1777
    %1779 = vmax.xlane.f32.xlu0 %v1762
    %v1780 = vpop.xlane.xlu0 %1779
    %1781 = vmax.xlane.f32.xlu0 %v1763
    %v1782 = vpop.xlane.xlu0 %1781
    %1783 = vmax.xlane.f32.xlu0 %v1764
    %v1784 = vpop.xlane.xlu0 %1783
    %1785 = vmax.xlane.f32.xlu0 %v1765
    %v1786 = vpop.xlane.xlu0 %1785
    %1787 = vmax.xlane.f32.xlu0 %v1766
    %v1788 = vpop.xlane.xlu0 %1787
    %1789 = vmax.xlane.f32.xlu0 %v1767
    %v1790 = vpop.xlane.xlu0 %1789
    %1791 = vmax.xlane.f32.xlu0 %v1768
    %v1792 = vpop.xlane.xlu0 %1791
    %1793 = vmax.xlane.f32.xlu0 %v1769
    %v1794 = vpop.xlane.xlu0 %1793
    %1795 = vmax.xlane.f32.xlu0 %v1770
    %v1796 = vpop.xlane.xlu0 %1795
    %1797 = vmax.xlane.f32.xlu0 %v1771
    %v1798 = vpop.xlane.xlu0 %1797
    %1799 = vmax.xlane.f32.xlu0 %v1772
    %v1800 = vpop.xlane.xlu0 %1799
    %1801 = vmax.xlane.f32.xlu0 %v1773
    %v1802 = vpop.xlane.xlu0 %1801
    %1803 = vmax.xlane.f32.xlu0 %v1774
    %v1804 = vpop.xlane.xlu0 %1803
    %1805 = vmax.xlane.f32.xlu0 %v1775
    %v1806 = vpop.xlane.xlu0 %1805
    %1807 = vmax.xlane.f32.xlu0 %v1776
    %v1808 = vpop.xlane.xlu0 %1807
    %v1809 = vsub.f32 %v1761, %v1778
    %v1810 = vsub.f32 %v1762, %v1780
    %v1811 = vsub.f32 %v1763, %v1782
    %v1812 = vsub.f32 %v1764, %v1784
    %v1813 = vsub.f32 %v1765, %v1786
    %v1814 = vsub.f32 %v1766, %v1788
    %v1815 = vsub.f32 %v1767, %v1790
    %v1816 = vsub.f32 %v1768, %v1792
    %v1817 = vsub.f32 %v1769, %v1794
    %v1818 = vsub.f32 %v1770, %v1796
    %v1819 = vsub.f32 %v1771, %v1798
    %v1820 = vsub.f32 %v1772, %v1800
    %v1821 = vsub.f32 %v1773, %v1802
    %v1822 = vsub.f32 %v1774, %v1804
    %v1823 = vsub.f32 %v1775, %v1806
    %v1824 = vsub.f32 %v1776, %v1808
    %v1825 = vmul.f32 %v1809, 1.442695
    %v1826 = vpow.pop %v1825
    %v1827 = vmul.f32 %v1810, 1.442695
    %v1828 = vpow.pop %v1827
    %v1829 = vmul.f32 %v1811, 1.442695
    %v1830 = vpow.pop %v1829
    %v1831 = vmul.f32 %v1812, 1.442695
    %v1832 = vpow.pop %v1831
    %v1833 = vmul.f32 %v1813, 1.442695
    %v1834 = vpow.pop %v1833
    %v1835 = vmul.f32 %v1814, 1.442695
    %v1836 = vpow.pop %v1835
    %v1837 = vmul.f32 %v1815, 1.442695
    %v1838 = vpow.pop %v1837
    %v1839 = vmul.f32 %v1816, 1.442695
    %v1840 = vpow.pop %v1839
    %v1841 = vmul.f32 %v1817, 1.442695
    %v1842 = vpow.pop %v1841
    %v1843 = vmul.f32 %v1818, 1.442695
    %v1844 = vpow.pop %v1843
    %v1845 = vmul.f32 %v1819, 1.442695
    %v1846 = vpow.pop %v1845
    %v1847 = vmul.f32 %v1820, 1.442695
    %v1848 = vpow.pop %v1847
    %v1849 = vmul.f32 %v1821, 1.442695
    %v1850 = vpow.pop %v1849
    %v1851 = vmul.f32 %v1822, 1.442695
    %v1852 = vpow.pop %v1851
    %v1853 = vmul.f32 %v1823, 1.442695
    %v1854 = vpow.pop %v1853
    %v1855 = vmul.f32 %v1824, 1.442695
    %v1856 = vpow.pop %v1855
    %1857 = vadd.xlane.f32.xlu0 %v1826
    %v1858 = vpop.xlane.xlu0 %1857
    %1859 = vadd.xlane.f32.xlu0 %v1828
    %v1860 = vpop.xlane.xlu0 %1859
    %1861 = vadd.xlane.f32.xlu0 %v1830
    %v1862 = vpop.xlane.xlu0 %1861
    %1863 = vadd.xlane.f32.xlu0 %v1832
    %v1864 = vpop.xlane.xlu0 %1863
    %1865 = vadd.xlane.f32.xlu0 %v1834
    %v1866 = vpop.xlane.xlu0 %1865
    %1867 = vadd.xlane.f32.xlu0 %v1836
    %v1868 = vpop.xlane.xlu0 %1867
    %1869 = vadd.xlane.f32.xlu0 %v1838
    %v1870 = vpop.xlane.xlu0 %1869
    %1871 = vadd.xlane.f32.xlu0 %v1840
    %v1872 = vpop.xlane.xlu0 %1871
    %1873 = vadd.xlane.f32.xlu0 %v1842
    %v1874 = vpop.xlane.xlu0 %1873
    %1875 = vadd.xlane.f32.xlu0 %v1844
    %v1876 = vpop.xlane.xlu0 %1875
    %1877 = vadd.xlane.f32.xlu0 %v1846
    %v1878 = vpop.xlane.xlu0 %1877
    %1879 = vadd.xlane.f32.xlu0 %v1848
    %v1880 = vpop.xlane.xlu0 %1879
    %1881 = vadd.xlane.f32.xlu0 %v1850
    %v1882 = vpop.xlane.xlu0 %1881
    %1883 = vadd.xlane.f32.xlu0 %v1852
    %v1884 = vpop.xlane.xlu0 %1883
    %1885 = vadd.xlane.f32.xlu0 %v1854
    %v1886 = vpop.xlane.xlu0 %1885
    %1887 = vadd.xlane.f32.xlu0 %v1856
    %v1888 = vpop.xlane.xlu0 %1887
    %v1889 = vlog2.pop %v1858
    %v1890 = vmul.f32 %v1889, 0.6931472
    %v1891 = vlog2.pop %v1860
    %v1892 = vmul.f32 %v1891, 0.6931472
    %v1893 = vlog2.pop %v1862
    %v1894 = vmul.f32 %v1893, 0.6931472
    %v1895 = vlog2.pop %v1864
    %v1896 = vmul.f32 %v1895, 0.6931472
    %v1897 = vlog2.pop %v1866
    %v1898 = vmul.f32 %v1897, 0.6931472
    %v1899 = vlog2.pop %v1868
    %v1900 = vmul.f32 %v1899, 0.6931472
    %v1901 = vlog2.pop %v1870
    %v1902 = vmul.f32 %v1901, 0.6931472
    %v1903 = vlog2.pop %v1872
    %v1904 = vmul.f32 %v1903, 0.6931472
    %v1905 = vlog2.pop %v1874
    %v1906 = vmul.f32 %v1905, 0.6931472
    %v1907 = vlog2.pop %v1876
    %v1908 = vmul.f32 %v1907, 0.6931472
    %v1909 = vlog2.pop %v1878
    %v1910 = vmul.f32 %v1909, 0.6931472
    %v1911 = vlog2.pop %v1880
    %v1912 = vmul.f32 %v1911, 0.6931472
    %v1913 = vlog2.pop %v1882
    %v1914 = vmul.f32 %v1913, 0.6931472
    %v1915 = vlog2.pop %v1884
    %v1916 = vmul.f32 %v1915, 0.6931472
    %v1917 = vlog2.pop %v1886
    %v1918 = vmul.f32 %v1917, 0.6931472
    %v1919 = vlog2.pop %v1888
    %v1920 = vmul.f32 %v1919, 0.6931472
    %v1921 = vsub.f32 %v1809, %v1890
    %v1922 = vsub.f32 %v1810, %v1892
    %v1923 = vsub.f32 %v1811, %v1894
    %v1924 = vsub.f32 %v1812, %v1896
    %v1925 = vsub.f32 %v1813, %v1898
    %v1926 = vsub.f32 %v1814, %v1900
    %v1927 = vsub.f32 %v1815, %v1902
    %v1928 = vsub.f32 %v1816, %v1904
    %v1929 = vsub.f32 %v1817, %v1906
    %v1930 = vsub.f32 %v1818, %v1908
    %v1931 = vsub.f32 %v1819, %v1910
    %v1932 = vsub.f32 %v1820, %v1912
    %v1933 = vsub.f32 %v1821, %v1914
    %v1934 = vsub.f32 %v1822, %v1916
    %v1935 = vsub.f32 %v1823, %v1918
    %v1936 = vsub.f32 %v1824, %v1920
    %1937 = vst [vmem:[#allocation10] sm:$0xff] %v1921
    %1938 = vst [vmem:[#allocation10 + $0x8] sm:$0xff] %v1922
    %1939 = vst [vmem:[#allocation10 + $0x10] sm:$0xff] %v1923
    %1940 = vst [vmem:[#allocation10 + $0x18] sm:$0xff] %v1924
    %1941 = vst [vmem:[#allocation10 + $0x20] sm:$0xff] %v1925
    %1942 = vst [vmem:[#allocation10 + $0x28] sm:$0xff] %v1926
    %1943 = vst [vmem:[#allocation10 + $0x30] sm:$0xff] %v1927
    %1944 = vst [vmem:[#allocation10 + $0x38] sm:$0xff] %v1928
    %1945 = vst [vmem:[#allocation10 + $0x40] sm:$0xff] %v1929
    %1946 = vst [vmem:[#allocation10 + $0x48] sm:$0xff] %v1930
    %1947 = vst [vmem:[#allocation10 + $0x50] sm:$0xff] %v1931
    %1948 = vst [vmem:[#allocation10 + $0x58] sm:$0xff] %v1932
    %1949 = vst [vmem:[#allocation10 + $0x60] sm:$0xff] %v1933
    %1950 = vst [vmem:[#allocation10 + $0x68] sm:$0xff] %v1934
    %1951 = vst [vmem:[#allocation10 + $0x70] sm:$0xff] %v1935
    %1952 = vst [vmem:[#allocation10 + $0x78] sm:$0xff] %v1936
    // Predicated region
    $region46: #{tpu_custom_call.1} parent=1 // pred_check
      _
    $region47: #{tpu_custom_call.1} parent=1 // pred_check_branch
      %1954 = sbr.rel (0) target = $region49
    $region48: #{tpu_custom_call.1} parent=1 // pred_region
      %s1956 = ssub.s32 2048, 2048
      %1957 = vsyncadd [#allocation4], %s1956
      %s1958 = sshll.u32 [#allocation10], 4
      %s1959 = int_to_ptr.vmem [resolvable:$true] %s1958
      %1964 = dma.vmem_to_hbm [thread:$0]  %s1959, 2048, %s7, [#allocation4], 128, 128, 8
    $region49: #{tpu_custom_call.1} parent=1 // pred_fallthru
      _
    // Predicated region
    $region50: #{tpu_custom_call.1} parent=1 // pred_check
      _
    $region51: #{tpu_custom_call.1} parent=1 // pred_check_branch
      %1966 = sbr.rel (0) target = $region53
    $region52: #{tpu_custom_call.1} parent=1 // pred_region
      %1967 = dma.done [#allocation4], 2048
    $region53: #{tpu_custom_call.1} parent=1 // pred_fallthru
      _
    %1968 = vsyncpa [#allocation3], 1
    %1969 = vsyncpa [#allocation6], 1
    %1970 = vsyncpa [#allocation9], 1
    %1971 = vsyncpa [#allocation4], 1

</llo_original>
